<compile_context>
chip_gen: v5e
topology: v5e:2x2
jax: 0.10.0
libtpu: 0.0.40
codegen_flags: <defaults>
</compile_context>

<pallas_src>
import functools
import math

import jax
import jax.numpy as jnp
from jax.experimental import pallas as pl
from jax.experimental.pallas import tpu as pltpu


# -----------------------------------------------------------------------------
# Fused whole-model kernel (single invocation, whole batch resident in VMEM)
# -----------------------------------------------------------------------------
def _model_kernel(
    x_ref,                        # (B*S, F) input rows
    bn_scale_ref, shift_pe_ref,   # (1, D) folded BN scale, (B*S, D) BN-shift + PE
    embed_w_ref, embed_b_ref,
    wq_ref, bq_ref, wk_ref, bk_ref, wv_ref, bv_ref,
    out_w_ref, out_b_ref,
    lin1_w_ref, lin1_b_ref, lin2_w_ref, lin2_b_ref,
    ln1_g_ref, ln1_b_ref, ln2_g_ref, ln2_b_ref,
    fc_w_ref, fc_b_ref,
    o_ref,                        # (B, C) logits
    *, batch, seq, num_layers, num_heads, ln_eps, matmul_dtype,
):
    B, S = batch, seq
    D = embed_w_ref.shape[1]
    H = num_heads
    dh = D // H
    scale = 1.0 / math.sqrt(dh)

    def mm(a, w):
        # 2-D MXU matmul; bf16 operands by default, f32 accumulation.
        return jnp.dot(a.astype(matmul_dtype), w.astype(matmul_dtype),
                       preferred_element_type=jnp.float32)

    def bmm(eq, a, b):
        # Batched (leading batch dim) matmul — the Mosaic-supported einsum form.
        return jnp.einsum(eq, a.astype(matmul_dtype), b.astype(matmul_dtype),
                          preferred_element_type=jnp.float32)

    def layer_norm(h, g, b):
        mean = jnp.mean(h, axis=-1, keepdims=True)
        var = jnp.mean(jnp.square(h - mean), axis=-1, keepdims=True)
        return (h - mean) * jax.lax.rsqrt(var + ln_eps) * g + b

    # ---- input projection + folded BatchNorm1d (eval) + positional encoding ----
    h = mm(x_ref[...], embed_w_ref[...]) + embed_b_ref[...]       # (N, D)
    h = h * bn_scale_ref[...] + shift_pe_ref[...]                 # BN + PE folded
    # TODO(synk): dropout (p=0.1) is identity at inference; not modeled.

    # ---- post-norm TransformerEncoder layers (ReLU FFN, dim_ff = 2*D) ----
    for li in range(num_layers):
        # Full-width q/k/v projections on all B*S rows (no packed-QKV extracts).
        q3 = (mm(h, wq_ref[li]) + bq_ref[li]).reshape(B, S, D)
        k3 = (mm(h, wk_ref[li]) + bk_ref[li]).reshape(B, S, D)
        v3 = (mm(h, wv_ref[li]) + bv_ref[li]).reshape(B, S, D)
        w_o = out_w_ref[li]                                       # (D, D)
        attn = out_b_ref[li]                                      # (1, D) -> bcast
        for hd in range(H):
            lo = hd * dh
            s = bmm('bqd,bkd->bqk',
                    q3[:, :, lo:lo + dh], k3[:, :, lo:lo + dh]) * scale   # (B,S,S)
            m = jnp.max(s, axis=-1, keepdims=True)
            p = jnp.exp(s - m)
            denom = jnp.sum(p, axis=-1, keepdims=True)
            p = p * pl.reciprocal(denom, approx=True)             # EUP, not VALU div
            o_h = bmm('bqk,bkd->bqd', p, v3[:, :, lo:lo + dh])    # (B,S,dh)
            # concat(heads) @ Wo  ==  sum_h  o_h @ Wo[rows of head h]
            attn = attn + mm(o_h.reshape(B * S, dh), w_o[lo:lo + dh, :])
        h = layer_norm(h + attn, ln1_g_ref[li], ln1_b_ref[li])

        ff = jnp.maximum(mm(h, lin1_w_ref[li]) + lin1_b_ref[li], 0.0)
        ff = mm(ff, lin2_w_ref[li]) + lin2_b_ref[li]
        h = layer_norm(h + ff, ln2_g_ref[li], ln2_b_ref[li])

    # ---- pooling (mean / max over seq) + classifier, no lane concat ----
    h3 = h.reshape(B, S, D)
    mean_p = jnp.mean(h3, axis=1)                                 # (B, D)
    max_p = jnp.max(h3, axis=1)                                   # (B, D)
    logits = (mm(mean_p, fc_w_ref[:D, :])                         # concat(mean,max)@W
              + mm(max_p, fc_w_ref[D:, :])
              + fc_b_ref[...])
    o_ref[...] = logits.astype(o_ref.dtype)                       # single (B,C) store


# -----------------------------------------------------------------------------
# jit'ed wrapper: builds the single pallas_call
# -----------------------------------------------------------------------------
@functools.partial(jax.jit, static_argnames=("num_heads", "matmul_dtype"))
def transformer_model_forward(x, params, num_heads, matmul_dtype=jnp.bfloat16):
    B, S, F = x.shape
    D = params["embed_w"].shape[1]
    C = params["fc_w"].shape[1]
    Dff = params["lin1_w"].shape[2]
    L = int(params["wq"].shape[0])
    N = B * S

    # Fold eval-mode BatchNorm1d into scale/shift; pre-add the PE rows (XLA glue).
    inv = jax.lax.rsqrt(params["bn_var"] + 1e-5)
    bn_scale = (params["bn_gamma"] * inv).reshape(1, D)
    bn_shift = (params["bn_beta"]
                - params["bn_mean"] * params["bn_gamma"] * inv).reshape(1, D)
    shift_pe = jnp.tile(bn_shift + params["pe"][:S], (B, 1))      # (N, D)

    x_rows = x.reshape(N, F)                                      # fold B into rows

    operands = (
        x_rows, bn_scale, shift_pe,
        params["embed_w"], params["embed_b"],
        params["wq"], params["bq"], params["wk"], params["bk"],
        params["wv"], params["bv"],
        params["out_w"], params["out_b"],
        params["lin1_w"], params["lin1_b"], params["lin2_w"], params["lin2_b"],
        params["ln1_g"], params["ln1_b"], params["ln2_g"], params["ln2_b"],
        params["fc_w"], params["fc_b"],
    )

    kernel = functools.partial(
        _model_kernel, batch=B, seq=S, num_layers=L, num_heads=num_heads,
        ln_eps=1e-5, matmul_dtype=matmul_dtype)

    # Advisory cost estimate so XLA can overlap glue with the custom call.
    flops = 2 * N * F * D                                         # embed
    flops += L * (3 * 2 * N * D * D                               # q/k/v proj
                  + 2 * 2 * N * S * D                             # scores + p@v
                  + 2 * N * D * D                                 # out proj
                  + 2 * 2 * N * D * Dff)                          # FFN
    flops += 2 * B * (2 * D) * C                                  # classifier
    transcendentals = L * num_heads * B * S * S                   # softmax exp
    bytes_accessed = (sum(int(a.size) * a.dtype.itemsize for a in operands)
                      + B * C * 4)
    cost = pl.CostEstimate(flops=flops, transcendentals=transcendentals,
                           bytes_accessed=bytes_accessed)

    out = pl.pallas_call(
        kernel,
        out_shape=jax.ShapeDtypeStruct((B, C), jnp.float32),
        cost_estimate=cost,
        compiler_params=pltpu.CompilerParams(
            vmem_limit_bytes=32 * 1024 * 1024),   # safe on v5e/v6e/v7x at this size
    )(*operands)
    return out


# -----------------------------------------------------------------------------
# Parameter initialization (deterministic; weights pre-transposed to (Din, Dout),
# attention in_proj pre-split into Wq / Wk / Wv)
# -----------------------------------------------------------------------------
def init_params(key, input_size, hidden_size, num_layers, num_heads, num_classes,
                max_len=100):
    D, F, C = hidden_size, input_size, num_classes
    Dff = 2 * D            # nn.TransformerEncoderLayer(dim_feedforward=hidden*2)

    def dense_t(k, din, dout):
        kw, kb = jax.random.split(k)
        bound = 1.0 / math.sqrt(din)
        w = jax.random.uniform(kw, (din, dout), jnp.float32, -bound, bound)
        b = jax.random.uniform(kb, (1, dout), jnp.float32, -bound, bound)
        return w, b

    keys = jax.random.split(key, 2 + num_layers)
    params = {}
    params["embed_w"], params["embed_b"] = dense_t(keys[0], F, D)
    params["fc_w"], params["fc_b"] = dense_t(keys[1], 2 * D, C)

    # BatchNorm1d parameters + running stats (eval-mode forward).
    params["bn_gamma"] = jnp.ones((D,), jnp.float32)
    params["bn_beta"] = jnp.zeros((D,), jnp.float32)
    params["bn_mean"] = jnp.zeros((D,), jnp.float32)
    params["bn_var"] = jnp.ones((D,), jnp.float32)

    # Sinusoidal positional encoding table.
    position = jnp.arange(max_len, dtype=jnp.float32)[:, None]
    div_term = jnp.exp(jnp.arange(0, D, 2, dtype=jnp.float32)
                       * (-math.log(10000.0) / D))
    pe = jnp.zeros((max_len, D), jnp.float32)
    pe = pe.at[:, 0::2].set(jnp.sin(position * div_term))
    pe = pe.at[:, 1::2].set(jnp.cos(position * div_term))
    params["pe"] = pe

    names = ("wq", "bq", "wk", "bk", "wv", "bv", "out_w", "out_b",
             "lin1_w", "lin1_b", "lin2_w", "lin2_b",
             "ln1_g", "ln1_b", "ln2_g", "ln2_b")
    per_layer = {n: [] for n in names}
    for li in range(num_layers):
        lk = jax.random.split(keys[2 + li], 6)
        for nm_w, nm_b, kk in (("wq", "bq", lk[0]),
                               ("wk", "bk", lk[1]),
                               ("wv", "bv", lk[2])):
            w, b = dense_t(kk, D, D)
            per_layer[nm_w].append(w)
            per_layer[nm_b].append(b)
        w, b = dense_t(lk[3], D, D)
        per_layer["out_w"].append(w); per_layer["out_b"].append(b)
        w, b = dense_t(lk[4], D, Dff)
        per_layer["lin1_w"].append(w); per_layer["lin1_b"].append(b)
        w, b = dense_t(lk[5], Dff, D)
        per_layer["lin2_w"].append(w); per_layer["lin2_b"].append(b)
        per_layer["ln1_g"].append(jnp.ones((1, D), jnp.float32))
        per_layer["ln1_b"].append(jnp.zeros((1, D), jnp.float32))
        per_layer["ln2_g"].append(jnp.ones((1, D), jnp.float32))
        per_layer["ln2_b"].append(jnp.zeros((1, D), jnp.float32))
    for n in names:
        params[n] = jnp.stack(per_layer[n], axis=0)
    return params


# -----------------------------------------------------------------------------
# Main
# -----------------------------------------------------------------------------
if __name__ == "__main__":
    input_size = 16
    hidden_size = 32
    num_layers = 2
    num_heads = 4
    num_classes = 5
    batch, seq = 2, 8

    key = jax.random.PRNGKey(0)
    k_params, k_x = jax.random.split(key)

    params = init_params(k_params, input_size, hidden_size, num_layers,
                         num_heads, num_classes, max_len=100)
    x = jax.random.normal(k_x, (batch, seq, input_size), jnp.float32)

    # Default: bf16 MXU operands (f32 accumulation) — fastest on v5e/v6e/v7x.
    # Pass matmul_dtype=jnp.float32 for closer numeric parity with PyTorch.
    out = transformer_model_forward(x, params, num_heads=num_heads)
    out = jax.block_until_ready(out)
    assert out.shape == (batch, num_classes), out.shape
    print("KERNEL_OK")
</pallas_src>

<mosaic_0001>
module attributes {stable_mosaic.version = 11 : i64} {
  func.func @_model_kernel(%arg0: memref<16x16xf32, #tpu.memory_space<vmem>>, %arg1: memref<1x32xf32, #tpu.memory_space<vmem>>, %arg2: memref<16x32xf32, #tpu.memory_space<vmem>>, %arg3: memref<16x32xf32, #tpu.memory_space<vmem>>, %arg4: memref<1x32xf32, #tpu.memory_space<vmem>>, %arg5: memref<2x32x32xf32, #tpu.memory_space<vmem>>, %arg6: memref<2x1x32xf32, #tpu.memory_space<vmem>>, %arg7: memref<2x32x32xf32, #tpu.memory_space<vmem>>, %arg8: memref<2x1x32xf32, #tpu.memory_space<vmem>>, %arg9: memref<2x32x32xf32, #tpu.memory_space<vmem>>, %arg10: memref<2x1x32xf32, #tpu.memory_space<vmem>>, %arg11: memref<2x32x32xf32, #tpu.memory_space<vmem>>, %arg12: memref<2x1x32xf32, #tpu.memory_space<vmem>>, %arg13: memref<2x32x64xf32, #tpu.memory_space<vmem>>, %arg14: memref<2x1x64xf32, #tpu.memory_space<vmem>>, %arg15: memref<2x64x32xf32, #tpu.memory_space<vmem>>, %arg16: memref<2x1x32xf32, #tpu.memory_space<vmem>>, %arg17: memref<2x1x32xf32, #tpu.memory_space<vmem>>, %arg18: memref<2x1x32xf32, #tpu.memory_space<vmem>>, %arg19: memref<2x1x32xf32, #tpu.memory_space<vmem>>, %arg20: memref<2x1x32xf32, #tpu.memory_space<vmem>>, %arg21: memref<64x5xf32, #tpu.memory_space<vmem>>, %arg22: memref<1x5xf32, #tpu.memory_space<vmem>>, %arg23: memref<2x5xf32, #tpu.memory_space<vmem>>) attributes {dimension_semantics = [], scalar_prefetch = 0 : i64, scratch_operands = 0 : i64, tpu.core_type = #tpu.core_type<tc>} {
    %c0 = arith.constant 0 : index
    %c0_0 = arith.constant 0 : index
    %0 = vector.load %arg0[%c0, %c0_0] : memref<16x16xf32, #tpu.memory_space<vmem>>, vector<16x16xf32>
    %c0_1 = arith.constant 0 : index
    %c0_2 = arith.constant 0 : index
    %1 = vector.load %arg3[%c0_1, %c0_2] : memref<16x32xf32, #tpu.memory_space<vmem>>, vector<16x32xf32>
    %2 = arith.truncf %0 : vector<16x16xf32> to vector<16x16xbf16>
    %3 = arith.truncf %1 : vector<16x32xf32> to vector<16x32xbf16>
    %cst = arith.constant dense<0.000000e+00> : vector<16x32xf32>
    %4 = tpu.matmul %2, %3, %cst {dimension_numbers = #tpu.dot_dimension_numbers<[1], [0], [0], [1], [0, 0, 1, 1], [], []>} : vector<16x16xbf16>, vector<16x32xbf16>, vector<16x32xf32> -> vector<16x32xf32>
    %c0_3 = arith.constant 0 : index
    %c0_4 = arith.constant 0 : index
    %5 = vector.load %arg4[%c0_3, %c0_4] : memref<1x32xf32, #tpu.memory_space<vmem>>, vector<1x32xf32>
    %6 = vector.broadcast %5 : vector<1x32xf32> to vector<16x32xf32>
    %7 = arith.addf %4, %6 : vector<16x32xf32>
    %c0_5 = arith.constant 0 : index
    %c0_6 = arith.constant 0 : index
    %8 = vector.load %arg1[%c0_5, %c0_6] : memref<1x32xf32, #tpu.memory_space<vmem>>, vector<1x32xf32>
    %9 = vector.broadcast %8 : vector<1x32xf32> to vector<16x32xf32>
    %10 = arith.mulf %7, %9 : vector<16x32xf32>
    %c0_7 = arith.constant 0 : index
    %c0_8 = arith.constant 0 : index
    %11 = vector.load %arg2[%c0_7, %c0_8] : memref<16x32xf32, #tpu.memory_space<vmem>>, vector<16x32xf32>
    %12 = arith.addf %10, %11 : vector<16x32xf32>
    %c0_9 = arith.constant 0 : index
    %c0_10 = arith.constant 0 : index
    %c0_11 = arith.constant 0 : index
    %13 = vector.load %arg5[%c0_9, %c0_10, %c0_11] : memref<2x32x32xf32, #tpu.memory_space<vmem>>, vector<1x32x32xf32>
    %14 = vector.shape_cast %13 : vector<1x32x32xf32> to vector<32x32xf32>
    %15 = arith.truncf %12 : vector<16x32xf32> to vector<16x32xbf16>
    %16 = arith.truncf %14 : vector<32x32xf32> to vector<32x32xbf16>
    %cst_12 = arith.constant dense<0.000000e+00> : vector<16x32xf32>
    %17 = tpu.matmul %15, %16, %cst_12 {dimension_numbers = #tpu.dot_dimension_numbers<[1], [0], [0], [1], [0, 0, 1, 1], [], []>} : vector<16x32xbf16>, vector<32x32xbf16>, vector<16x32xf32> -> vector<16x32xf32>
    %c0_13 = arith.constant 0 : index
    %c0_14 = arith.constant 0 : index
    %c0_15 = arith.constant 0 : index
    %18 = vector.load %arg6[%c0_13, %c0_14, %c0_15] : memref<2x1x32xf32, #tpu.memory_space<vmem>>, vector<1x1x32xf32>
    %19 = vector.shape_cast %18 : vector<1x1x32xf32> to vector<1x32xf32>
    %20 = vector.broadcast %19 : vector<1x32xf32> to vector<16x32xf32>
    %21 = arith.addf %17, %20 : vector<16x32xf32>
    %22 = vector.shape_cast %21 : vector<16x32xf32> to vector<2x8x32xf32>
    %c0_16 = arith.constant 0 : index
    %c0_17 = arith.constant 0 : index
    %c0_18 = arith.constant 0 : index
    %23 = vector.load %arg7[%c0_16, %c0_17, %c0_18] : memref<2x32x32xf32, #tpu.memory_space<vmem>>, vector<1x32x32xf32>
    %24 = vector.shape_cast %23 : vector<1x32x32xf32> to vector<32x32xf32>
    %25 = arith.truncf %12 : vector<16x32xf32> to vector<16x32xbf16>
    %26 = arith.truncf %24 : vector<32x32xf32> to vector<32x32xbf16>
    %cst_19 = arith.constant dense<0.000000e+00> : vector<16x32xf32>
    %27 = tpu.matmul %25, %26, %cst_19 {dimension_numbers = #tpu.dot_dimension_numbers<[1], [0], [0], [1], [0, 0, 1, 1], [], []>} : vector<16x32xbf16>, vector<32x32xbf16>, vector<16x32xf32> -> vector<16x32xf32>
    %c0_20 = arith.constant 0 : index
    %c0_21 = arith.constant 0 : index
    %c0_22 = arith.constant 0 : index
    %28 = vector.load %arg8[%c0_20, %c0_21, %c0_22] : memref<2x1x32xf32, #tpu.memory_space<vmem>>, vector<1x1x32xf32>
    %29 = vector.shape_cast %28 : vector<1x1x32xf32> to vector<1x32xf32>
    %30 = vector.broadcast %29 : vector<1x32xf32> to vector<16x32xf32>
    %31 = arith.addf %27, %30 : vector<16x32xf32>
    %32 = vector.shape_cast %31 : vector<16x32xf32> to vector<2x8x32xf32>
    %c0_23 = arith.constant 0 : index
    %c0_24 = arith.constant 0 : index
    %c0_25 = arith.constant 0 : index
    %33 = vector.load %arg9[%c0_23, %c0_24, %c0_25] : memref<2x32x32xf32, #tpu.memory_space<vmem>>, vector<1x32x32xf32>
    %34 = vector.shape_cast %33 : vector<1x32x32xf32> to vector<32x32xf32>
    %35 = arith.truncf %12 : vector<16x32xf32> to vector<16x32xbf16>
    %36 = arith.truncf %34 : vector<32x32xf32> to vector<32x32xbf16>
    %cst_26 = arith.constant dense<0.000000e+00> : vector<16x32xf32>
    %37 = tpu.matmul %35, %36, %cst_26 {dimension_numbers = #tpu.dot_dimension_numbers<[1], [0], [0], [1], [0, 0, 1, 1], [], []>} : vector<16x32xbf16>, vector<32x32xbf16>, vector<16x32xf32> -> vector<16x32xf32>
    %c0_27 = arith.constant 0 : index
    %c0_28 = arith.constant 0 : index
    %c0_29 = arith.constant 0 : index
    %38 = vector.load %arg10[%c0_27, %c0_28, %c0_29] : memref<2x1x32xf32, #tpu.memory_space<vmem>>, vector<1x1x32xf32>
    %39 = vector.shape_cast %38 : vector<1x1x32xf32> to vector<1x32xf32>
    %40 = vector.broadcast %39 : vector<1x32xf32> to vector<16x32xf32>
    %41 = arith.addf %37, %40 : vector<16x32xf32>
    %42 = vector.shape_cast %41 : vector<16x32xf32> to vector<2x8x32xf32>
    %c0_30 = arith.constant 0 : index
    %c0_31 = arith.constant 0 : index
    %c0_32 = arith.constant 0 : index
    %43 = vector.load %arg11[%c0_30, %c0_31, %c0_32] : memref<2x32x32xf32, #tpu.memory_space<vmem>>, vector<1x32x32xf32>
    %44 = vector.shape_cast %43 : vector<1x32x32xf32> to vector<32x32xf32>
    %c0_33 = arith.constant 0 : index
    %c0_34 = arith.constant 0 : index
    %c0_35 = arith.constant 0 : index
    %45 = vector.load %arg12[%c0_33, %c0_34, %c0_35] : memref<2x1x32xf32, #tpu.memory_space<vmem>>, vector<1x1x32xf32>
    %46 = vector.shape_cast %45 : vector<1x1x32xf32> to vector<1x32xf32>
    %47 = vector.extract_strided_slice %22 {offsets = [0, 0, 0], sizes = [2, 8, 8], strides = [1, 1, 1]} : vector<2x8x32xf32> to vector<2x8x8xf32>
    %48 = vector.extract_strided_slice %32 {offsets = [0, 0, 0], sizes = [2, 8, 8], strides = [1, 1, 1]} : vector<2x8x32xf32> to vector<2x8x8xf32>
    %49 = arith.truncf %47 : vector<2x8x8xf32> to vector<2x8x8xbf16>
    %50 = arith.truncf %48 : vector<2x8x8xf32> to vector<2x8x8xbf16>
    "tpu.trace_start"() <{level = 10 : i32, message = "bqd,bkd->bqk"}> : () -> ()
    %cst_36 = arith.constant dense<0.000000e+00> : vector<2x8x8xf32>
    %51 = tpu.matmul %49, %50, %cst_36 {dimension_numbers = #tpu.dot_dimension_numbers<[2], [2], [1], [1], [0, 0, 0, 1, 1, 1], [0], [0]>} : vector<2x8x8xbf16>, vector<2x8x8xbf16>, vector<2x8x8xf32> -> vector<2x8x8xf32>
    "tpu.trace_stop"() : () -> ()
    %cst_37 = arith.constant 0.353553385 : f32
    %52 = vector.broadcast %cst_37 : f32 to vector<2x8x8xf32>
    %53 = arith.mulf %51, %52 : vector<2x8x8xf32>
    %cst_38 = arith.constant dense<0xFF800000> : vector<2x8xf32>
    %54 = vector.multi_reduction <maximumf>, %53, %cst_38 [2] : vector<2x8x8xf32> to vector<2x8xf32>
    %55 = vector.shape_cast %54 : vector<2x8xf32> to vector<2x8x1xf32>
    %56 = vector.broadcast %55 : vector<2x8x1xf32> to vector<2x8x8xf32>
    %57 = arith.subf %53, %56 : vector<2x8x8xf32>
    %58 = math.exp %57 : vector<2x8x8xf32>
    %cst_39 = arith.constant dense<0.000000e+00> : vector<2x8xf32>
    %59 = vector.multi_reduction <add>, %58, %cst_39 [2] : vector<2x8x8xf32> to vector<2x8xf32>
    %60 = vector.shape_cast %59 : vector<2x8xf32> to vector<2x8x1xf32>
    %61 = tpu.reciprocal %60 {approx = true} : vector<2x8x1xf32> -> vector<2x8x1xf32>
    %62 = vector.broadcast %61 : vector<2x8x1xf32> to vector<2x8x8xf32>
    %63 = arith.mulf %58, %62 : vector<2x8x8xf32>
    %64 = vector.extract_strided_slice %42 {offsets = [0, 0, 0], sizes = [2, 8, 8], strides = [1, 1, 1]} : vector<2x8x32xf32> to vector<2x8x8xf32>
    %65 = arith.truncf %63 : vector<2x8x8xf32> to vector<2x8x8xbf16>
    %66 = arith.truncf %64 : vector<2x8x8xf32> to vector<2x8x8xbf16>
    "tpu.trace_start"() <{level = 10 : i32, message = "bqk,bkd->bqd"}> : () -> ()
    %cst_40 = arith.constant dense<0.000000e+00> : vector<2x8x8xf32>
    %67 = tpu.matmul %65, %66, %cst_40 {dimension_numbers = #tpu.dot_dimension_numbers<[2], [1], [1], [2], [0, 0, 0, 1, 1, 2], [0], [0]>} : vector<2x8x8xbf16>, vector<2x8x8xbf16>, vector<2x8x8xf32> -> vector<2x8x8xf32>
    "tpu.trace_stop"() : () -> ()
    %68 = vector.shape_cast %67 : vector<2x8x8xf32> to vector<16x8xf32>
    %69 = vector.extract_strided_slice %44 {offsets = [0, 0], sizes = [8, 32], strides = [1, 1]} : vector<32x32xf32> to vector<8x32xf32>
    %70 = arith.truncf %68 : vector<16x8xf32> to vector<16x8xbf16>
    %71 = arith.truncf %69 : vector<8x32xf32> to vector<8x32xbf16>
    %cst_41 = arith.constant dense<0.000000e+00> : vector<16x32xf32>
    %72 = tpu.matmul %70, %71, %cst_41 {dimension_numbers = #tpu.dot_dimension_numbers<[1], [0], [0], [1], [0, 0, 1, 1], [], []>} : vector<16x8xbf16>, vector<8x32xbf16>, vector<16x32xf32> -> vector<16x32xf32>
    %73 = vector.broadcast %46 : vector<1x32xf32> to vector<16x32xf32>
    %74 = arith.addf %73, %72 : vector<16x32xf32>
    %75 = vector.extract_strided_slice %22 {offsets = [0, 0, 8], sizes = [2, 8, 8], strides = [1, 1, 1]} : vector<2x8x32xf32> to vector<2x8x8xf32>
    %76 = vector.extract_strided_slice %32 {offsets = [0, 0, 8], sizes = [2, 8, 8], strides = [1, 1, 1]} : vector<2x8x32xf32> to vector<2x8x8xf32>
    %77 = arith.truncf %75 : vector<2x8x8xf32> to vector<2x8x8xbf16>
    %78 = arith.truncf %76 : vector<2x8x8xf32> to vector<2x8x8xbf16>
    "tpu.trace_start"() <{level = 10 : i32, message = "bqd,bkd->bqk"}> : () -> ()
    %cst_42 = arith.constant dense<0.000000e+00> : vector<2x8x8xf32>
    %79 = tpu.matmul %77, %78, %cst_42 {dimension_numbers = #tpu.dot_dimension_numbers<[2], [2], [1], [1], [0, 0, 0, 1, 1, 1], [0], [0]>} : vector<2x8x8xbf16>, vector<2x8x8xbf16>, vector<2x8x8xf32> -> vector<2x8x8xf32>
    "tpu.trace_stop"() : () -> ()
    %cst_43 = arith.constant 0.353553385 : f32
    %80 = vector.broadcast %cst_43 : f32 to vector<2x8x8xf32>
    %81 = arith.mulf %79, %80 : vector<2x8x8xf32>
    %cst_44 = arith.constant dense<0xFF800000> : vector<2x8xf32>
    %82 = vector.multi_reduction <maximumf>, %81, %cst_44 [2] : vector<2x8x8xf32> to vector<2x8xf32>
    %83 = vector.shape_cast %82 : vector<2x8xf32> to vector<2x8x1xf32>
    %84 = vector.broadcast %83 : vector<2x8x1xf32> to vector<2x8x8xf32>
    %85 = arith.subf %81, %84 : vector<2x8x8xf32>
    %86 = math.exp %85 : vector<2x8x8xf32>
    %cst_45 = arith.constant dense<0.000000e+00> : vector<2x8xf32>
    %87 = vector.multi_reduction <add>, %86, %cst_45 [2] : vector<2x8x8xf32> to vector<2x8xf32>
    %88 = vector.shape_cast %87 : vector<2x8xf32> to vector<2x8x1xf32>
    %89 = tpu.reciprocal %88 {approx = true} : vector<2x8x1xf32> -> vector<2x8x1xf32>
    %90 = vector.broadcast %89 : vector<2x8x1xf32> to vector<2x8x8xf32>
    %91 = arith.mulf %86, %90 : vector<2x8x8xf32>
    %92 = vector.extract_strided_slice %42 {offsets = [0, 0, 8], sizes = [2, 8, 8], strides = [1, 1, 1]} : vector<2x8x32xf32> to vector<2x8x8xf32>
    %93 = arith.truncf %91 : vector<2x8x8xf32> to vector<2x8x8xbf16>
    %94 = arith.truncf %92 : vector<2x8x8xf32> to vector<2x8x8xbf16>
    "tpu.trace_start"() <{level = 10 : i32, message = "bqk,bkd->bqd"}> : () -> ()
    %cst_46 = arith.constant dense<0.000000e+00> : vector<2x8x8xf32>
    %95 = tpu.matmul %93, %94, %cst_46 {dimension_numbers = #tpu.dot_dimension_numbers<[2], [1], [1], [2], [0, 0, 0, 1, 1, 2], [0], [0]>} : vector<2x8x8xbf16>, vector<2x8x8xbf16>, vector<2x8x8xf32> -> vector<2x8x8xf32>
    "tpu.trace_stop"() : () -> ()
    %96 = vector.shape_cast %95 : vector<2x8x8xf32> to vector<16x8xf32>
    %97 = vector.extract_strided_slice %44 {offsets = [8, 0], sizes = [8, 32], strides = [1, 1]} : vector<32x32xf32> to vector<8x32xf32>
    %98 = arith.truncf %96 : vector<16x8xf32> to vector<16x8xbf16>
    %99 = arith.truncf %97 : vector<8x32xf32> to vector<8x32xbf16>
    %cst_47 = arith.constant dense<0.000000e+00> : vector<16x32xf32>
    %100 = tpu.matmul %98, %99, %cst_47 {dimension_numbers = #tpu.dot_dimension_numbers<[1], [0], [0], [1], [0, 0, 1, 1], [], []>} : vector<16x8xbf16>, vector<8x32xbf16>, vector<16x32xf32> -> vector<16x32xf32>
    %101 = arith.addf %74, %100 : vector<16x32xf32>
    %102 = vector.extract_strided_slice %22 {offsets = [0, 0, 16], sizes = [2, 8, 8], strides = [1, 1, 1]} : vector<2x8x32xf32> to vector<2x8x8xf32>
    %103 = vector.extract_strided_slice %32 {offsets = [0, 0, 16], sizes = [2, 8, 8], strides = [1, 1, 1]} : vector<2x8x32xf32> to vector<2x8x8xf32>
    %104 = arith.truncf %102 : vector<2x8x8xf32> to vector<2x8x8xbf16>
    %105 = arith.truncf %103 : vector<2x8x8xf32> to vector<2x8x8xbf16>
    "tpu.trace_start"() <{level = 10 : i32, message = "bqd,bkd->bqk"}> : () -> ()
    %cst_48 = arith.constant dense<0.000000e+00> : vector<2x8x8xf32>
    %106 = tpu.matmul %104, %105, %cst_48 {dimension_numbers = #tpu.dot_dimension_numbers<[2], [2], [1], [1], [0, 0, 0, 1, 1, 1], [0], [0]>} : vector<2x8x8xbf16>, vector<2x8x8xbf16>, vector<2x8x8xf32> -> vector<2x8x8xf32>
    "tpu.trace_stop"() : () -> ()
    %cst_49 = arith.constant 0.353553385 : f32
    %107 = vector.broadcast %cst_49 : f32 to vector<2x8x8xf32>
    %108 = arith.mulf %106, %107 : vector<2x8x8xf32>
    %cst_50 = arith.constant dense<0xFF800000> : vector<2x8xf32>
    %109 = vector.multi_reduction <maximumf>, %108, %cst_50 [2] : vector<2x8x8xf32> to vector<2x8xf32>
    %110 = vector.shape_cast %109 : vector<2x8xf32> to vector<2x8x1xf32>
    %111 = vector.broadcast %110 : vector<2x8x1xf32> to vector<2x8x8xf32>
    %112 = arith.subf %108, %111 : vector<2x8x8xf32>
    %113 = math.exp %112 : vector<2x8x8xf32>
    %cst_51 = arith.constant dense<0.000000e+00> : vector<2x8xf32>
    %114 = vector.multi_reduction <add>, %113, %cst_51 [2] : vector<2x8x8xf32> to vector<2x8xf32>
    %115 = vector.shape_cast %114 : vector<2x8xf32> to vector<2x8x1xf32>
    %116 = tpu.reciprocal %115 {approx = true} : vector<2x8x1xf32> -> vector<2x8x1xf32>
    %117 = vector.broadcast %116 : vector<2x8x1xf32> to vector<2x8x8xf32>
    %118 = arith.mulf %113, %117 : vector<2x8x8xf32>
    %119 = vector.extract_strided_slice %42 {offsets = [0, 0, 16], sizes = [2, 8, 8], strides = [1, 1, 1]} : vector<2x8x32xf32> to vector<2x8x8xf32>
    %120 = arith.truncf %118 : vector<2x8x8xf32> to vector<2x8x8xbf16>
    %121 = arith.truncf %119 : vector<2x8x8xf32> to vector<2x8x8xbf16>
    "tpu.trace_start"() <{level = 10 : i32, message = "bqk,bkd->bqd"}> : () -> ()
    %cst_52 = arith.constant dense<0.000000e+00> : vector<2x8x8xf32>
    %122 = tpu.matmul %120, %121, %cst_52 {dimension_numbers = #tpu.dot_dimension_numbers<[2], [1], [1], [2], [0, 0, 0, 1, 1, 2], [0], [0]>} : vector<2x8x8xbf16>, vector<2x8x8xbf16>, vector<2x8x8xf32> -> vector<2x8x8xf32>
    "tpu.trace_stop"() : () -> ()
    %123 = vector.shape_cast %122 : vector<2x8x8xf32> to vector<16x8xf32>
    %124 = vector.extract_strided_slice %44 {offsets = [16, 0], sizes = [8, 32], strides = [1, 1]} : vector<32x32xf32> to vector<8x32xf32>
    %125 = arith.truncf %123 : vector<16x8xf32> to vector<16x8xbf16>
    %126 = arith.truncf %124 : vector<8x32xf32> to vector<8x32xbf16>
    %cst_53 = arith.constant dense<0.000000e+00> : vector<16x32xf32>
    %127 = tpu.matmul %125, %126, %cst_53 {dimension_numbers = #tpu.dot_dimension_numbers<[1], [0], [0], [1], [0, 0, 1, 1], [], []>} : vector<16x8xbf16>, vector<8x32xbf16>, vector<16x32xf32> -> vector<16x32xf32>
    %128 = arith.addf %101, %127 : vector<16x32xf32>
    %129 = vector.extract_strided_slice %22 {offsets = [0, 0, 24], sizes = [2, 8, 8], strides = [1, 1, 1]} : vector<2x8x32xf32> to vector<2x8x8xf32>
    %130 = vector.extract_strided_slice %32 {offsets = [0, 0, 24], sizes = [2, 8, 8], strides = [1, 1, 1]} : vector<2x8x32xf32> to vector<2x8x8xf32>
    %131 = arith.truncf %129 : vector<2x8x8xf32> to vector<2x8x8xbf16>
    %132 = arith.truncf %130 : vector<2x8x8xf32> to vector<2x8x8xbf16>
    "tpu.trace_start"() <{level = 10 : i32, message = "bqd,bkd->bqk"}> : () -> ()
    %cst_54 = arith.constant dense<0.000000e+00> : vector<2x8x8xf32>
    %133 = tpu.matmul %131, %132, %cst_54 {dimension_numbers = #tpu.dot_dimension_numbers<[2], [2], [1], [1], [0, 0, 0, 1, 1, 1], [0], [0]>} : vector<2x8x8xbf16>, vector<2x8x8xbf16>, vector<2x8x8xf32> -> vector<2x8x8xf32>
    "tpu.trace_stop"() : () -> ()
    %cst_55 = arith.constant 0.353553385 : f32
    %134 = vector.broadcast %cst_55 : f32 to vector<2x8x8xf32>
    %135 = arith.mulf %133, %134 : vector<2x8x8xf32>
    %cst_56 = arith.constant dense<0xFF800000> : vector<2x8xf32>
    %136 = vector.multi_reduction <maximumf>, %135, %cst_56 [2] : vector<2x8x8xf32> to vector<2x8xf32>
    %137 = vector.shape_cast %136 : vector<2x8xf32> to vector<2x8x1xf32>
    %138 = vector.broadcast %137 : vector<2x8x1xf32> to vector<2x8x8xf32>
    %139 = arith.subf %135, %138 : vector<2x8x8xf32>
    %140 = math.exp %139 : vector<2x8x8xf32>
    %cst_57 = arith.constant dense<0.000000e+00> : vector<2x8xf32>
    %141 = vector.multi_reduction <add>, %140, %cst_57 [2] : vector<2x8x8xf32> to vector<2x8xf32>
    %142 = vector.shape_cast %141 : vector<2x8xf32> to vector<2x8x1xf32>
    %143 = tpu.reciprocal %142 {approx = true} : vector<2x8x1xf32> -> vector<2x8x1xf32>
    %144 = vector.broadcast %143 : vector<2x8x1xf32> to vector<2x8x8xf32>
    %145 = arith.mulf %140, %144 : vector<2x8x8xf32>
    %146 = vector.extract_strided_slice %42 {offsets = [0, 0, 24], sizes = [2, 8, 8], strides = [1, 1, 1]} : vector<2x8x32xf32> to vector<2x8x8xf32>
    %147 = arith.truncf %145 : vector<2x8x8xf32> to vector<2x8x8xbf16>
    %148 = arith.truncf %146 : vector<2x8x8xf32> to vector<2x8x8xbf16>
    "tpu.trace_start"() <{level = 10 : i32, message = "bqk,bkd->bqd"}> : () -> ()
    %cst_58 = arith.constant dense<0.000000e+00> : vector<2x8x8xf32>
    %149 = tpu.matmul %147, %148, %cst_58 {dimension_numbers = #tpu.dot_dimension_numbers<[2], [1], [1], [2], [0, 0, 0, 1, 1, 2], [0], [0]>} : vector<2x8x8xbf16>, vector<2x8x8xbf16>, vector<2x8x8xf32> -> vector<2x8x8xf32>
    "tpu.trace_stop"() : () -> ()
    %150 = vector.shape_cast %149 : vector<2x8x8xf32> to vector<16x8xf32>
    %151 = vector.extract_strided_slice %44 {offsets = [24, 0], sizes = [8, 32], strides = [1, 1]} : vector<32x32xf32> to vector<8x32xf32>
    %152 = arith.truncf %150 : vector<16x8xf32> to vector<16x8xbf16>
    %153 = arith.truncf %151 : vector<8x32xf32> to vector<8x32xbf16>
    %cst_59 = arith.constant dense<0.000000e+00> : vector<16x32xf32>
    %154 = tpu.matmul %152, %153, %cst_59 {dimension_numbers = #tpu.dot_dimension_numbers<[1], [0], [0], [1], [0, 0, 1, 1], [], []>} : vector<16x8xbf16>, vector<8x32xbf16>, vector<16x32xf32> -> vector<16x32xf32>
    %155 = arith.addf %128, %154 : vector<16x32xf32>
    %156 = arith.addf %12, %155 : vector<16x32xf32>
    %c0_60 = arith.constant 0 : index
    %c0_61 = arith.constant 0 : index
    %c0_62 = arith.constant 0 : index
    %157 = vector.load %arg17[%c0_60, %c0_61, %c0_62] : memref<2x1x32xf32, #tpu.memory_space<vmem>>, vector<1x1x32xf32>
    %158 = vector.shape_cast %157 : vector<1x1x32xf32> to vector<1x32xf32>
    %c0_63 = arith.constant 0 : index
    %c0_64 = arith.constant 0 : index
    %c0_65 = arith.constant 0 : index
    %159 = vector.load %arg18[%c0_63, %c0_64, %c0_65] : memref<2x1x32xf32, #tpu.memory_space<vmem>>, vector<1x1x32xf32>
    %160 = vector.shape_cast %159 : vector<1x1x32xf32> to vector<1x32xf32>
    %cst_66 = arith.constant dense<0.000000e+00> : vector<16xf32>
    %161 = vector.multi_reduction <add>, %156, %cst_66 [1] : vector<16x32xf32> to vector<16xf32>
    %162 = vector.shape_cast %161 : vector<16xf32> to vector<16x1xf32>
    %cst_67 = arith.constant 3.200000e+01 : f32
    %163 = vector.broadcast %cst_67 : f32 to vector<16x1xf32>
    %164 = arith.divf %162, %163 : vector<16x1xf32>
    %165 = vector.broadcast %164 : vector<16x1xf32> to vector<16x32xf32>
    %166 = arith.subf %156, %165 : vector<16x32xf32>
    %167 = arith.mulf %166, %166 : vector<16x32xf32>
    %cst_68 = arith.constant dense<0.000000e+00> : vector<16xf32>
    %168 = vector.multi_reduction <add>, %167, %cst_68 [1] : vector<16x32xf32> to vector<16xf32>
    %169 = vector.shape_cast %168 : vector<16xf32> to vector<16x1xf32>
    %cst_69 = arith.constant 3.200000e+01 : f32
    %170 = vector.broadcast %cst_69 : f32 to vector<16x1xf32>
    %171 = arith.divf %169, %170 : vector<16x1xf32>
    %172 = vector.broadcast %164 : vector<16x1xf32> to vector<16x32xf32>
    %173 = arith.subf %156, %172 : vector<16x32xf32>
    %cst_70 = arith.constant 9.99999974E-6 : f32
    %174 = vector.broadcast %cst_70 : f32 to vector<16x1xf32>
    %175 = arith.addf %171, %174 : vector<16x1xf32>
    %176 = math.rsqrt %175 : vector<16x1xf32>
    %177 = vector.broadcast %176 : vector<16x1xf32> to vector<16x32xf32>
    %178 = arith.mulf %173, %177 : vector<16x32xf32>
    %179 = vector.broadcast %158 : vector<1x32xf32> to vector<16x32xf32>
    %180 = arith.mulf %178, %179 : vector<16x32xf32>
    %181 = vector.broadcast %160 : vector<1x32xf32> to vector<16x32xf32>
    %182 = arith.addf %180, %181 : vector<16x32xf32>
    %c0_71 = arith.constant 0 : index
    %c0_72 = arith.constant 0 : index
    %c0_73 = arith.constant 0 : index
    %183 = vector.load %arg13[%c0_71, %c0_72, %c0_73] : memref<2x32x64xf32, #tpu.memory_space<vmem>>, vector<1x32x64xf32>
    %184 = vector.shape_cast %183 : vector<1x32x64xf32> to vector<32x64xf32>
    %185 = arith.truncf %182 : vector<16x32xf32> to vector<16x32xbf16>
    %186 = arith.truncf %184 : vector<32x64xf32> to vector<32x64xbf16>
    %cst_74 = arith.constant dense<0.000000e+00> : vector<16x64xf32>
    %187 = tpu.matmul %185, %186, %cst_74 {dimension_numbers = #tpu.dot_dimension_numbers<[1], [0], [0], [1], [0, 0, 1, 1], [], []>} : vector<16x32xbf16>, vector<32x64xbf16>, vector<16x64xf32> -> vector<16x64xf32>
    %c0_75 = arith.constant 0 : index
    %c0_76 = arith.constant 0 : index
    %c0_77 = arith.constant 0 : index
    %188 = vector.load %arg14[%c0_75, %c0_76, %c0_77] : memref<2x1x64xf32, #tpu.memory_space<vmem>>, vector<1x1x64xf32>
    %189 = vector.shape_cast %188 : vector<1x1x64xf32> to vector<1x64xf32>
    %190 = vector.broadcast %189 : vector<1x64xf32> to vector<16x64xf32>
    %191 = arith.addf %187, %190 : vector<16x64xf32>
    %cst_78 = arith.constant 0.000000e+00 : f32
    %192 = vector.broadcast %cst_78 : f32 to vector<16x64xf32>
    %193 = arith.maximumf %191, %192 : vector<16x64xf32>
    %c0_79 = arith.constant 0 : index
    %c0_80 = arith.constant 0 : index
    %c0_81 = arith.constant 0 : index
    %194 = vector.load %arg15[%c0_79, %c0_80, %c0_81] : memref<2x64x32xf32, #tpu.memory_space<vmem>>, vector<1x64x32xf32>
    %195 = vector.shape_cast %194 : vector<1x64x32xf32> to vector<64x32xf32>
    %196 = arith.truncf %193 : vector<16x64xf32> to vector<16x64xbf16>
    %197 = arith.truncf %195 : vector<64x32xf32> to vector<64x32xbf16>
    %cst_82 = arith.constant dense<0.000000e+00> : vector<16x32xf32>
    %198 = tpu.matmul %196, %197, %cst_82 {dimension_numbers = #tpu.dot_dimension_numbers<[1], [0], [0], [1], [0, 0, 1, 1], [], []>} : vector<16x64xbf16>, vector<64x32xbf16>, vector<16x32xf32> -> vector<16x32xf32>
    %c0_83 = arith.constant 0 : index
    %c0_84 = arith.constant 0 : index
    %c0_85 = arith.constant 0 : index
    %199 = vector.load %arg16[%c0_83, %c0_84, %c0_85] : memref<2x1x32xf32, #tpu.memory_space<vmem>>, vector<1x1x32xf32>
    %200 = vector.shape_cast %199 : vector<1x1x32xf32> to vector<1x32xf32>
    %201 = vector.broadcast %200 : vector<1x32xf32> to vector<16x32xf32>
    %202 = arith.addf %198, %201 : vector<16x32xf32>
    %203 = arith.addf %182, %202 : vector<16x32xf32>
    %c0_86 = arith.constant 0 : index
    %c0_87 = arith.constant 0 : index
    %c0_88 = arith.constant 0 : index
    %204 = vector.load %arg19[%c0_86, %c0_87, %c0_88] : memref<2x1x32xf32, #tpu.memory_space<vmem>>, vector<1x1x32xf32>
    %205 = vector.shape_cast %204 : vector<1x1x32xf32> to vector<1x32xf32>
    %c0_89 = arith.constant 0 : index
    %c0_90 = arith.constant 0 : index
    %c0_91 = arith.constant 0 : index
    %206 = vector.load %arg20[%c0_89, %c0_90, %c0_91] : memref<2x1x32xf32, #tpu.memory_space<vmem>>, vector<1x1x32xf32>
    %207 = vector.shape_cast %206 : vector<1x1x32xf32> to vector<1x32xf32>
    %cst_92 = arith.constant dense<0.000000e+00> : vector<16xf32>
    %208 = vector.multi_reduction <add>, %203, %cst_92 [1] : vector<16x32xf32> to vector<16xf32>
    %209 = vector.shape_cast %208 : vector<16xf32> to vector<16x1xf32>
    %cst_93 = arith.constant 3.200000e+01 : f32
    %210 = vector.broadcast %cst_93 : f32 to vector<16x1xf32>
    %211 = arith.divf %209, %210 : vector<16x1xf32>
    %212 = vector.broadcast %211 : vector<16x1xf32> to vector<16x32xf32>
    %213 = arith.subf %203, %212 : vector<16x32xf32>
    %214 = arith.mulf %213, %213 : vector<16x32xf32>
    %cst_94 = arith.constant dense<0.000000e+00> : vector<16xf32>
    %215 = vector.multi_reduction <add>, %214, %cst_94 [1] : vector<16x32xf32> to vector<16xf32>
    %216 = vector.shape_cast %215 : vector<16xf32> to vector<16x1xf32>
    %cst_95 = arith.constant 3.200000e+01 : f32
    %217 = vector.broadcast %cst_95 : f32 to vector<16x1xf32>
    %218 = arith.divf %216, %217 : vector<16x1xf32>
    %219 = vector.broadcast %211 : vector<16x1xf32> to vector<16x32xf32>
    %220 = arith.subf %203, %219 : vector<16x32xf32>
    %cst_96 = arith.constant 9.99999974E-6 : f32
    %221 = vector.broadcast %cst_96 : f32 to vector<16x1xf32>
    %222 = arith.addf %218, %221 : vector<16x1xf32>
    %223 = math.rsqrt %222 : vector<16x1xf32>
    %224 = vector.broadcast %223 : vector<16x1xf32> to vector<16x32xf32>
    %225 = arith.mulf %220, %224 : vector<16x32xf32>
    %226 = vector.broadcast %205 : vector<1x32xf32> to vector<16x32xf32>
    %227 = arith.mulf %225, %226 : vector<16x32xf32>
    %228 = vector.broadcast %207 : vector<1x32xf32> to vector<16x32xf32>
    %229 = arith.addf %227, %228 : vector<16x32xf32>
    %c1 = arith.constant 1 : index
    %c0_97 = arith.constant 0 : index
    %c0_98 = arith.constant 0 : index
    %230 = vector.load %arg5[%c1, %c0_97, %c0_98] : memref<2x32x32xf32, #tpu.memory_space<vmem>>, vector<1x32x32xf32>
    %231 = vector.shape_cast %230 : vector<1x32x32xf32> to vector<32x32xf32>
    %232 = arith.truncf %229 : vector<16x32xf32> to vector<16x32xbf16>
    %233 = arith.truncf %231 : vector<32x32xf32> to vector<32x32xbf16>
    %cst_99 = arith.constant dense<0.000000e+00> : vector<16x32xf32>
    %234 = tpu.matmul %232, %233, %cst_99 {dimension_numbers = #tpu.dot_dimension_numbers<[1], [0], [0], [1], [0, 0, 1, 1], [], []>} : vector<16x32xbf16>, vector<32x32xbf16>, vector<16x32xf32> -> vector<16x32xf32>
    %c1_100 = arith.constant 1 : index
    %c0_101 = arith.constant 0 : index
    %c0_102 = arith.constant 0 : index
    %235 = vector.load %arg6[%c1_100, %c0_101, %c0_102] : memref<2x1x32xf32, #tpu.memory_space<vmem>>, vector<1x1x32xf32>
    %236 = vector.shape_cast %235 : vector<1x1x32xf32> to vector<1x32xf32>
    %237 = vector.broadcast %236 : vector<1x32xf32> to vector<16x32xf32>
    %238 = arith.addf %234, %237 : vector<16x32xf32>
    %239 = vector.shape_cast %238 : vector<16x32xf32> to vector<2x8x32xf32>
    %c1_103 = arith.constant 1 : index
    %c0_104 = arith.constant 0 : index
    %c0_105 = arith.constant 0 : index
    %240 = vector.load %arg7[%c1_103, %c0_104, %c0_105] : memref<2x32x32xf32, #tpu.memory_space<vmem>>, vector<1x32x32xf32>
    %241 = vector.shape_cast %240 : vector<1x32x32xf32> to vector<32x32xf32>
    %242 = arith.truncf %229 : vector<16x32xf32> to vector<16x32xbf16>
    %243 = arith.truncf %241 : vector<32x32xf32> to vector<32x32xbf16>
    %cst_106 = arith.constant dense<0.000000e+00> : vector<16x32xf32>
    %244 = tpu.matmul %242, %243, %cst_106 {dimension_numbers = #tpu.dot_dimension_numbers<[1], [0], [0], [1], [0, 0, 1, 1], [], []>} : vector<16x32xbf16>, vector<32x32xbf16>, vector<16x32xf32> -> vector<16x32xf32>
    %c1_107 = arith.constant 1 : index
    %c0_108 = arith.constant 0 : index
    %c0_109 = arith.constant 0 : index
    %245 = vector.load %arg8[%c1_107, %c0_108, %c0_109] : memref<2x1x32xf32, #tpu.memory_space<vmem>>, vector<1x1x32xf32>
    %246 = vector.shape_cast %245 : vector<1x1x32xf32> to vector<1x32xf32>
    %247 = vector.broadcast %246 : vector<1x32xf32> to vector<16x32xf32>
    %248 = arith.addf %244, %247 : vector<16x32xf32>
    %249 = vector.shape_cast %248 : vector<16x32xf32> to vector<2x8x32xf32>
    %c1_110 = arith.constant 1 : index
    %c0_111 = arith.constant 0 : index
    %c0_112 = arith.constant 0 : index
    %250 = vector.load %arg9[%c1_110, %c0_111, %c0_112] : memref<2x32x32xf32, #tpu.memory_space<vmem>>, vector<1x32x32xf32>
    %251 = vector.shape_cast %250 : vector<1x32x32xf32> to vector<32x32xf32>
    %252 = arith.truncf %229 : vector<16x32xf32> to vector<16x32xbf16>
    %253 = arith.truncf %251 : vector<32x32xf32> to vector<32x32xbf16>
    %cst_113 = arith.constant dense<0.000000e+00> : vector<16x32xf32>
    %254 = tpu.matmul %252, %253, %cst_113 {dimension_numbers = #tpu.dot_dimension_numbers<[1], [0], [0], [1], [0, 0, 1, 1], [], []>} : vector<16x32xbf16>, vector<32x32xbf16>, vector<16x32xf32> -> vector<16x32xf32>
    %c1_114 = arith.constant 1 : index
    %c0_115 = arith.constant 0 : index
    %c0_116 = arith.constant 0 : index
    %255 = vector.load %arg10[%c1_114, %c0_115, %c0_116] : memref<2x1x32xf32, #tpu.memory_space<vmem>>, vector<1x1x32xf32>
    %256 = vector.shape_cast %255 : vector<1x1x32xf32> to vector<1x32xf32>
    %257 = vector.broadcast %256 : vector<1x32xf32> to vector<16x32xf32>
    %258 = arith.addf %254, %257 : vector<16x32xf32>
    %259 = vector.shape_cast %258 : vector<16x32xf32> to vector<2x8x32xf32>
    %c1_117 = arith.constant 1 : index
    %c0_118 = arith.constant 0 : index
    %c0_119 = arith.constant 0 : index
    %260 = vector.load %arg11[%c1_117, %c0_118, %c0_119] : memref<2x32x32xf32, #tpu.memory_space<vmem>>, vector<1x32x32xf32>
    %261 = vector.shape_cast %260 : vector<1x32x32xf32> to vector<32x32xf32>
    %c1_120 = arith.constant 1 : index
    %c0_121 = arith.constant 0 : index
    %c0_122 = arith.constant 0 : index
    %262 = vector.load %arg12[%c1_120, %c0_121, %c0_122] : memref<2x1x32xf32, #tpu.memory_space<vmem>>, vector<1x1x32xf32>
    %263 = vector.shape_cast %262 : vector<1x1x32xf32> to vector<1x32xf32>
    %264 = vector.extract_strided_slice %239 {offsets = [0, 0, 0], sizes = [2, 8, 8], strides = [1, 1, 1]} : vector<2x8x32xf32> to vector<2x8x8xf32>
    %265 = vector.extract_strided_slice %249 {offsets = [0, 0, 0], sizes = [2, 8, 8], strides = [1, 1, 1]} : vector<2x8x32xf32> to vector<2x8x8xf32>
    %266 = arith.truncf %264 : vector<2x8x8xf32> to vector<2x8x8xbf16>
    %267 = arith.truncf %265 : vector<2x8x8xf32> to vector<2x8x8xbf16>
    "tpu.trace_start"() <{level = 10 : i32, message = "bqd,bkd->bqk"}> : () -> ()
    %cst_123 = arith.constant dense<0.000000e+00> : vector<2x8x8xf32>
    %268 = tpu.matmul %266, %267, %cst_123 {dimension_numbers = #tpu.dot_dimension_numbers<[2], [2], [1], [1], [0, 0, 0, 1, 1, 1], [0], [0]>} : vector<2x8x8xbf16>, vector<2x8x8xbf16>, vector<2x8x8xf32> -> vector<2x8x8xf32>
    "tpu.trace_stop"() : () -> ()
    %cst_124 = arith.constant 0.353553385 : f32
    %269 = vector.broadcast %cst_124 : f32 to vector<2x8x8xf32>
    %270 = arith.mulf %268, %269 : vector<2x8x8xf32>
    %cst_125 = arith.constant dense<0xFF800000> : vector<2x8xf32>
    %271 = vector.multi_reduction <maximumf>, %270, %cst_125 [2] : vector<2x8x8xf32> to vector<2x8xf32>
    %272 = vector.shape_cast %271 : vector<2x8xf32> to vector<2x8x1xf32>
    %273 = vector.broadcast %272 : vector<2x8x1xf32> to vector<2x8x8xf32>
    %274 = arith.subf %270, %273 : vector<2x8x8xf32>
    %275 = math.exp %274 : vector<2x8x8xf32>
    %cst_126 = arith.constant dense<0.000000e+00> : vector<2x8xf32>
    %276 = vector.multi_reduction <add>, %275, %cst_126 [2] : vector<2x8x8xf32> to vector<2x8xf32>
    %277 = vector.shape_cast %276 : vector<2x8xf32> to vector<2x8x1xf32>
    %278 = tpu.reciprocal %277 {approx = true} : vector<2x8x1xf32> -> vector<2x8x1xf32>
    %279 = vector.broadcast %278 : vector<2x8x1xf32> to vector<2x8x8xf32>
    %280 = arith.mulf %275, %279 : vector<2x8x8xf32>
    %281 = vector.extract_strided_slice %259 {offsets = [0, 0, 0], sizes = [2, 8, 8], strides = [1, 1, 1]} : vector<2x8x32xf32> to vector<2x8x8xf32>
    %282 = arith.truncf %280 : vector<2x8x8xf32> to vector<2x8x8xbf16>
    %283 = arith.truncf %281 : vector<2x8x8xf32> to vector<2x8x8xbf16>
    "tpu.trace_start"() <{level = 10 : i32, message = "bqk,bkd->bqd"}> : () -> ()
    %cst_127 = arith.constant dense<0.000000e+00> : vector<2x8x8xf32>
    %284 = tpu.matmul %282, %283, %cst_127 {dimension_numbers = #tpu.dot_dimension_numbers<[2], [1], [1], [2], [0, 0, 0, 1, 1, 2], [0], [0]>} : vector<2x8x8xbf16>, vector<2x8x8xbf16>, vector<2x8x8xf32> -> vector<2x8x8xf32>
    "tpu.trace_stop"() : () -> ()
    %285 = vector.shape_cast %284 : vector<2x8x8xf32> to vector<16x8xf32>
    %286 = vector.extract_strided_slice %261 {offsets = [0, 0], sizes = [8, 32], strides = [1, 1]} : vector<32x32xf32> to vector<8x32xf32>
    %287 = arith.truncf %285 : vector<16x8xf32> to vector<16x8xbf16>
    %288 = arith.truncf %286 : vector<8x32xf32> to vector<8x32xbf16>
    %cst_128 = arith.constant dense<0.000000e+00> : vector<16x32xf32>
    %289 = tpu.matmul %287, %288, %cst_128 {dimension_numbers = #tpu.dot_dimension_numbers<[1], [0], [0], [1], [0, 0, 1, 1], [], []>} : vector<16x8xbf16>, vector<8x32xbf16>, vector<16x32xf32> -> vector<16x32xf32>
    %290 = vector.broadcast %263 : vector<1x32xf32> to vector<16x32xf32>
    %291 = arith.addf %290, %289 : vector<16x32xf32>
    %292 = vector.extract_strided_slice %239 {offsets = [0, 0, 8], sizes = [2, 8, 8], strides = [1, 1, 1]} : vector<2x8x32xf32> to vector<2x8x8xf32>
    %293 = vector.extract_strided_slice %249 {offsets = [0, 0, 8], sizes = [2, 8, 8], strides = [1, 1, 1]} : vector<2x8x32xf32> to vector<2x8x8xf32>
    %294 = arith.truncf %292 : vector<2x8x8xf32> to vector<2x8x8xbf16>
    %295 = arith.truncf %293 : vector<2x8x8xf32> to vector<2x8x8xbf16>
    "tpu.trace_start"() <{level = 10 : i32, message = "bqd,bkd->bqk"}> : () -> ()
    %cst_129 = arith.constant dense<0.000000e+00> : vector<2x8x8xf32>
    %296 = tpu.matmul %294, %295, %cst_129 {dimension_numbers = #tpu.dot_dimension_numbers<[2], [2], [1], [1], [0, 0, 0, 1, 1, 1], [0], [0]>} : vector<2x8x8xbf16>, vector<2x8x8xbf16>, vector<2x8x8xf32> -> vector<2x8x8xf32>
    "tpu.trace_stop"() : () -> ()
    %cst_130 = arith.constant 0.353553385 : f32
    %297 = vector.broadcast %cst_130 : f32 to vector<2x8x8xf32>
    %298 = arith.mulf %296, %297 : vector<2x8x8xf32>
    %cst_131 = arith.constant dense<0xFF800000> : vector<2x8xf32>
    %299 = vector.multi_reduction <maximumf>, %298, %cst_131 [2] : vector<2x8x8xf32> to vector<2x8xf32>
    %300 = vector.shape_cast %299 : vector<2x8xf32> to vector<2x8x1xf32>
    %301 = vector.broadcast %300 : vector<2x8x1xf32> to vector<2x8x8xf32>
    %302 = arith.subf %298, %301 : vector<2x8x8xf32>
    %303 = math.exp %302 : vector<2x8x8xf32>
    %cst_132 = arith.constant dense<0.000000e+00> : vector<2x8xf32>
    %304 = vector.multi_reduction <add>, %303, %cst_132 [2] : vector<2x8x8xf32> to vector<2x8xf32>
    %305 = vector.shape_cast %304 : vector<2x8xf32> to vector<2x8x1xf32>
    %306 = tpu.reciprocal %305 {approx = true} : vector<2x8x1xf32> -> vector<2x8x1xf32>
    %307 = vector.broadcast %306 : vector<2x8x1xf32> to vector<2x8x8xf32>
    %308 = arith.mulf %303, %307 : vector<2x8x8xf32>
    %309 = vector.extract_strided_slice %259 {offsets = [0, 0, 8], sizes = [2, 8, 8], strides = [1, 1, 1]} : vector<2x8x32xf32> to vector<2x8x8xf32>
    %310 = arith.truncf %308 : vector<2x8x8xf32> to vector<2x8x8xbf16>
    %311 = arith.truncf %309 : vector<2x8x8xf32> to vector<2x8x8xbf16>
    "tpu.trace_start"() <{level = 10 : i32, message = "bqk,bkd->bqd"}> : () -> ()
    %cst_133 = arith.constant dense<0.000000e+00> : vector<2x8x8xf32>
    %312 = tpu.matmul %310, %311, %cst_133 {dimension_numbers = #tpu.dot_dimension_numbers<[2], [1], [1], [2], [0, 0, 0, 1, 1, 2], [0], [0]>} : vector<2x8x8xbf16>, vector<2x8x8xbf16>, vector<2x8x8xf32> -> vector<2x8x8xf32>
    "tpu.trace_stop"() : () -> ()
    %313 = vector.shape_cast %312 : vector<2x8x8xf32> to vector<16x8xf32>
    %314 = vector.extract_strided_slice %261 {offsets = [8, 0], sizes = [8, 32], strides = [1, 1]} : vector<32x32xf32> to vector<8x32xf32>
    %315 = arith.truncf %313 : vector<16x8xf32> to vector<16x8xbf16>
    %316 = arith.truncf %314 : vector<8x32xf32> to vector<8x32xbf16>
    %cst_134 = arith.constant dense<0.000000e+00> : vector<16x32xf32>
    %317 = tpu.matmul %315, %316, %cst_134 {dimension_numbers = #tpu.dot_dimension_numbers<[1], [0], [0], [1], [0, 0, 1, 1], [], []>} : vector<16x8xbf16>, vector<8x32xbf16>, vector<16x32xf32> -> vector<16x32xf32>
    %318 = arith.addf %291, %317 : vector<16x32xf32>
    %319 = vector.extract_strided_slice %239 {offsets = [0, 0, 16], sizes = [2, 8, 8], strides = [1, 1, 1]} : vector<2x8x32xf32> to vector<2x8x8xf32>
    %320 = vector.extract_strided_slice %249 {offsets = [0, 0, 16], sizes = [2, 8, 8], strides = [1, 1, 1]} : vector<2x8x32xf32> to vector<2x8x8xf32>
    %321 = arith.truncf %319 : vector<2x8x8xf32> to vector<2x8x8xbf16>
    %322 = arith.truncf %320 : vector<2x8x8xf32> to vector<2x8x8xbf16>
    "tpu.trace_start"() <{level = 10 : i32, message = "bqd,bkd->bqk"}> : () -> ()
    %cst_135 = arith.constant dense<0.000000e+00> : vector<2x8x8xf32>
    %323 = tpu.matmul %321, %322, %cst_135 {dimension_numbers = #tpu.dot_dimension_numbers<[2], [2], [1], [1], [0, 0, 0, 1, 1, 1], [0], [0]>} : vector<2x8x8xbf16>, vector<2x8x8xbf16>, vector<2x8x8xf32> -> vector<2x8x8xf32>
    "tpu.trace_stop"() : () -> ()
    %cst_136 = arith.constant 0.353553385 : f32
    %324 = vector.broadcast %cst_136 : f32 to vector<2x8x8xf32>
    %325 = arith.mulf %323, %324 : vector<2x8x8xf32>
    %cst_137 = arith.constant dense<0xFF800000> : vector<2x8xf32>
    %326 = vector.multi_reduction <maximumf>, %325, %cst_137 [2] : vector<2x8x8xf32> to vector<2x8xf32>
    %327 = vector.shape_cast %326 : vector<2x8xf32> to vector<2x8x1xf32>
    %328 = vector.broadcast %327 : vector<2x8x1xf32> to vector<2x8x8xf32>
    %329 = arith.subf %325, %328 : vector<2x8x8xf32>
    %330 = math.exp %329 : vector<2x8x8xf32>
    %cst_138 = arith.constant dense<0.000000e+00> : vector<2x8xf32>
    %331 = vector.multi_reduction <add>, %330, %cst_138 [2] : vector<2x8x8xf32> to vector<2x8xf32>
    %332 = vector.shape_cast %331 : vector<2x8xf32> to vector<2x8x1xf32>
    %333 = tpu.reciprocal %332 {approx = true} : vector<2x8x1xf32> -> vector<2x8x1xf32>
    %334 = vector.broadcast %333 : vector<2x8x1xf32> to vector<2x8x8xf32>
    %335 = arith.mulf %330, %334 : vector<2x8x8xf32>
    %336 = vector.extract_strided_slice %259 {offsets = [0, 0, 16], sizes = [2, 8, 8], strides = [1, 1, 1]} : vector<2x8x32xf32> to vector<2x8x8xf32>
    %337 = arith.truncf %335 : vector<2x8x8xf32> to vector<2x8x8xbf16>
    %338 = arith.truncf %336 : vector<2x8x8xf32> to vector<2x8x8xbf16>
    "tpu.trace_start"() <{level = 10 : i32, message = "bqk,bkd->bqd"}> : () -> ()
    %cst_139 = arith.constant dense<0.000000e+00> : vector<2x8x8xf32>
    %339 = tpu.matmul %337, %338, %cst_139 {dimension_numbers = #tpu.dot_dimension_numbers<[2], [1], [1], [2], [0, 0, 0, 1, 1, 2], [0], [0]>} : vector<2x8x8xbf16>, vector<2x8x8xbf16>, vector<2x8x8xf32> -> vector<2x8x8xf32>
    "tpu.trace_stop"() : () -> ()
    %340 = vector.shape_cast %339 : vector<2x8x8xf32> to vector<16x8xf32>
    %341 = vector.extract_strided_slice %261 {offsets = [16, 0], sizes = [8, 32], strides = [1, 1]} : vector<32x32xf32> to vector<8x32xf32>
    %342 = arith.truncf %340 : vector<16x8xf32> to vector<16x8xbf16>
    %343 = arith.truncf %341 : vector<8x32xf32> to vector<8x32xbf16>
    %cst_140 = arith.constant dense<0.000000e+00> : vector<16x32xf32>
    %344 = tpu.matmul %342, %343, %cst_140 {dimension_numbers = #tpu.dot_dimension_numbers<[1], [0], [0], [1], [0, 0, 1, 1], [], []>} : vector<16x8xbf16>, vector<8x32xbf16>, vector<16x32xf32> -> vector<16x32xf32>
    %345 = arith.addf %318, %344 : vector<16x32xf32>
    %346 = vector.extract_strided_slice %239 {offsets = [0, 0, 24], sizes = [2, 8, 8], strides = [1, 1, 1]} : vector<2x8x32xf32> to vector<2x8x8xf32>
    %347 = vector.extract_strided_slice %249 {offsets = [0, 0, 24], sizes = [2, 8, 8], strides = [1, 1, 1]} : vector<2x8x32xf32> to vector<2x8x8xf32>
    %348 = arith.truncf %346 : vector<2x8x8xf32> to vector<2x8x8xbf16>
    %349 = arith.truncf %347 : vector<2x8x8xf32> to vector<2x8x8xbf16>
    "tpu.trace_start"() <{level = 10 : i32, message = "bqd,bkd->bqk"}> : () -> ()
    %cst_141 = arith.constant dense<0.000000e+00> : vector<2x8x8xf32>
    %350 = tpu.matmul %348, %349, %cst_141 {dimension_numbers = #tpu.dot_dimension_numbers<[2], [2], [1], [1], [0, 0, 0, 1, 1, 1], [0], [0]>} : vector<2x8x8xbf16>, vector<2x8x8xbf16>, vector<2x8x8xf32> -> vector<2x8x8xf32>
    "tpu.trace_stop"() : () -> ()
    %cst_142 = arith.constant 0.353553385 : f32
    %351 = vector.broadcast %cst_142 : f32 to vector<2x8x8xf32>
    %352 = arith.mulf %350, %351 : vector<2x8x8xf32>
    %cst_143 = arith.constant dense<0xFF800000> : vector<2x8xf32>
    %353 = vector.multi_reduction <maximumf>, %352, %cst_143 [2] : vector<2x8x8xf32> to vector<2x8xf32>
    %354 = vector.shape_cast %353 : vector<2x8xf32> to vector<2x8x1xf32>
    %355 = vector.broadcast %354 : vector<2x8x1xf32> to vector<2x8x8xf32>
    %356 = arith.subf %352, %355 : vector<2x8x8xf32>
    %357 = math.exp %356 : vector<2x8x8xf32>
    %cst_144 = arith.constant dense<0.000000e+00> : vector<2x8xf32>
    %358 = vector.multi_reduction <add>, %357, %cst_144 [2] : vector<2x8x8xf32> to vector<2x8xf32>
    %359 = vector.shape_cast %358 : vector<2x8xf32> to vector<2x8x1xf32>
    %360 = tpu.reciprocal %359 {approx = true} : vector<2x8x1xf32> -> vector<2x8x1xf32>
    %361 = vector.broadcast %360 : vector<2x8x1xf32> to vector<2x8x8xf32>
    %362 = arith.mulf %357, %361 : vector<2x8x8xf32>
    %363 = vector.extract_strided_slice %259 {offsets = [0, 0, 24], sizes = [2, 8, 8], strides = [1, 1, 1]} : vector<2x8x32xf32> to vector<2x8x8xf32>
    %364 = arith.truncf %362 : vector<2x8x8xf32> to vector<2x8x8xbf16>
    %365 = arith.truncf %363 : vector<2x8x8xf32> to vector<2x8x8xbf16>
    "tpu.trace_start"() <{level = 10 : i32, message = "bqk,bkd->bqd"}> : () -> ()
    %cst_145 = arith.constant dense<0.000000e+00> : vector<2x8x8xf32>
    %366 = tpu.matmul %364, %365, %cst_145 {dimension_numbers = #tpu.dot_dimension_numbers<[2], [1], [1], [2], [0, 0, 0, 1, 1, 2], [0], [0]>} : vector<2x8x8xbf16>, vector<2x8x8xbf16>, vector<2x8x8xf32> -> vector<2x8x8xf32>
    "tpu.trace_stop"() : () -> ()
    %367 = vector.shape_cast %366 : vector<2x8x8xf32> to vector<16x8xf32>
    %368 = vector.extract_strided_slice %261 {offsets = [24, 0], sizes = [8, 32], strides = [1, 1]} : vector<32x32xf32> to vector<8x32xf32>
    %369 = arith.truncf %367 : vector<16x8xf32> to vector<16x8xbf16>
    %370 = arith.truncf %368 : vector<8x32xf32> to vector<8x32xbf16>
    %cst_146 = arith.constant dense<0.000000e+00> : vector<16x32xf32>
    %371 = tpu.matmul %369, %370, %cst_146 {dimension_numbers = #tpu.dot_dimension_numbers<[1], [0], [0], [1], [0, 0, 1, 1], [], []>} : vector<16x8xbf16>, vector<8x32xbf16>, vector<16x32xf32> -> vector<16x32xf32>
    %372 = arith.addf %345, %371 : vector<16x32xf32>
    %373 = arith.addf %229, %372 : vector<16x32xf32>
    %c1_147 = arith.constant 1 : index
    %c0_148 = arith.constant 0 : index
    %c0_149 = arith.constant 0 : index
    %374 = vector.load %arg17[%c1_147, %c0_148, %c0_149] : memref<2x1x32xf32, #tpu.memory_space<vmem>>, vector<1x1x32xf32>
    %375 = vector.shape_cast %374 : vector<1x1x32xf32> to vector<1x32xf32>
    %c1_150 = arith.constant 1 : index
    %c0_151 = arith.constant 0 : index
    %c0_152 = arith.constant 0 : index
    %376 = vector.load %arg18[%c1_150, %c0_151, %c0_152] : memref<2x1x32xf32, #tpu.memory_space<vmem>>, vector<1x1x32xf32>
    %377 = vector.shape_cast %376 : vector<1x1x32xf32> to vector<1x32xf32>
    %cst_153 = arith.constant dense<0.000000e+00> : vector<16xf32>
    %378 = vector.multi_reduction <add>, %373, %cst_153 [1] : vector<16x32xf32> to vector<16xf32>
    %379 = vector.shape_cast %378 : vector<16xf32> to vector<16x1xf32>
    %cst_154 = arith.constant 3.200000e+01 : f32
    %380 = vector.broadcast %cst_154 : f32 to vector<16x1xf32>
    %381 = arith.divf %379, %380 : vector<16x1xf32>
    %382 = vector.broadcast %381 : vector<16x1xf32> to vector<16x32xf32>
    %383 = arith.subf %373, %382 : vector<16x32xf32>
    %384 = arith.mulf %383, %383 : vector<16x32xf32>
    %cst_155 = arith.constant dense<0.000000e+00> : vector<16xf32>
    %385 = vector.multi_reduction <add>, %384, %cst_155 [1] : vector<16x32xf32> to vector<16xf32>
    %386 = vector.shape_cast %385 : vector<16xf32> to vector<16x1xf32>
    %cst_156 = arith.constant 3.200000e+01 : f32
    %387 = vector.broadcast %cst_156 : f32 to vector<16x1xf32>
    %388 = arith.divf %386, %387 : vector<16x1xf32>
    %389 = vector.broadcast %381 : vector<16x1xf32> to vector<16x32xf32>
    %390 = arith.subf %373, %389 : vector<16x32xf32>
    %cst_157 = arith.constant 9.99999974E-6 : f32
    %391 = vector.broadcast %cst_157 : f32 to vector<16x1xf32>
    %392 = arith.addf %388, %391 : vector<16x1xf32>
    %393 = math.rsqrt %392 : vector<16x1xf32>
    %394 = vector.broadcast %393 : vector<16x1xf32> to vector<16x32xf32>
    %395 = arith.mulf %390, %394 : vector<16x32xf32>
    %396 = vector.broadcast %375 : vector<1x32xf32> to vector<16x32xf32>
    %397 = arith.mulf %395, %396 : vector<16x32xf32>
    %398 = vector.broadcast %377 : vector<1x32xf32> to vector<16x32xf32>
    %399 = arith.addf %397, %398 : vector<16x32xf32>
    %c1_158 = arith.constant 1 : index
    %c0_159 = arith.constant 0 : index
    %c0_160 = arith.constant 0 : index
    %400 = vector.load %arg13[%c1_158, %c0_159, %c0_160] : memref<2x32x64xf32, #tpu.memory_space<vmem>>, vector<1x32x64xf32>
    %401 = vector.shape_cast %400 : vector<1x32x64xf32> to vector<32x64xf32>
    %402 = arith.truncf %399 : vector<16x32xf32> to vector<16x32xbf16>
    %403 = arith.truncf %401 : vector<32x64xf32> to vector<32x64xbf16>
    %cst_161 = arith.constant dense<0.000000e+00> : vector<16x64xf32>
    %404 = tpu.matmul %402, %403, %cst_161 {dimension_numbers = #tpu.dot_dimension_numbers<[1], [0], [0], [1], [0, 0, 1, 1], [], []>} : vector<16x32xbf16>, vector<32x64xbf16>, vector<16x64xf32> -> vector<16x64xf32>
    %c1_162 = arith.constant 1 : index
    %c0_163 = arith.constant 0 : index
    %c0_164 = arith.constant 0 : index
    %405 = vector.load %arg14[%c1_162, %c0_163, %c0_164] : memref<2x1x64xf32, #tpu.memory_space<vmem>>, vector<1x1x64xf32>
    %406 = vector.shape_cast %405 : vector<1x1x64xf32> to vector<1x64xf32>
    %407 = vector.broadcast %406 : vector<1x64xf32> to vector<16x64xf32>
    %408 = arith.addf %404, %407 : vector<16x64xf32>
    %cst_165 = arith.constant 0.000000e+00 : f32
    %409 = vector.broadcast %cst_165 : f32 to vector<16x64xf32>
    %410 = arith.maximumf %408, %409 : vector<16x64xf32>
    %c1_166 = arith.constant 1 : index
    %c0_167 = arith.constant 0 : index
    %c0_168 = arith.constant 0 : index
    %411 = vector.load %arg15[%c1_166, %c0_167, %c0_168] : memref<2x64x32xf32, #tpu.memory_space<vmem>>, vector<1x64x32xf32>
    %412 = vector.shape_cast %411 : vector<1x64x32xf32> to vector<64x32xf32>
    %413 = arith.truncf %410 : vector<16x64xf32> to vector<16x64xbf16>
    %414 = arith.truncf %412 : vector<64x32xf32> to vector<64x32xbf16>
    %cst_169 = arith.constant dense<0.000000e+00> : vector<16x32xf32>
    %415 = tpu.matmul %413, %414, %cst_169 {dimension_numbers = #tpu.dot_dimension_numbers<[1], [0], [0], [1], [0, 0, 1, 1], [], []>} : vector<16x64xbf16>, vector<64x32xbf16>, vector<16x32xf32> -> vector<16x32xf32>
    %c1_170 = arith.constant 1 : index
    %c0_171 = arith.constant 0 : index
    %c0_172 = arith.constant 0 : index
    %416 = vector.load %arg16[%c1_170, %c0_171, %c0_172] : memref<2x1x32xf32, #tpu.memory_space<vmem>>, vector<1x1x32xf32>
    %417 = vector.shape_cast %416 : vector<1x1x32xf32> to vector<1x32xf32>
    %418 = vector.broadcast %417 : vector<1x32xf32> to vector<16x32xf32>
    %419 = arith.addf %415, %418 : vector<16x32xf32>
    %420 = arith.addf %399, %419 : vector<16x32xf32>
    %c1_173 = arith.constant 1 : index
    %c0_174 = arith.constant 0 : index
    %c0_175 = arith.constant 0 : index
    %421 = vector.load %arg19[%c1_173, %c0_174, %c0_175] : memref<2x1x32xf32, #tpu.memory_space<vmem>>, vector<1x1x32xf32>
    %422 = vector.shape_cast %421 : vector<1x1x32xf32> to vector<1x32xf32>
    %c1_176 = arith.constant 1 : index
    %c0_177 = arith.constant 0 : index
    %c0_178 = arith.constant 0 : index
    %423 = vector.load %arg20[%c1_176, %c0_177, %c0_178] : memref<2x1x32xf32, #tpu.memory_space<vmem>>, vector<1x1x32xf32>
    %424 = vector.shape_cast %423 : vector<1x1x32xf32> to vector<1x32xf32>
    %cst_179 = arith.constant dense<0.000000e+00> : vector<16xf32>
    %425 = vector.multi_reduction <add>, %420, %cst_179 [1] : vector<16x32xf32> to vector<16xf32>
    %426 = vector.shape_cast %425 : vector<16xf32> to vector<16x1xf32>
    %cst_180 = arith.constant 3.200000e+01 : f32
    %427 = vector.broadcast %cst_180 : f32 to vector<16x1xf32>
    %428 = arith.divf %426, %427 : vector<16x1xf32>
    %429 = vector.broadcast %428 : vector<16x1xf32> to vector<16x32xf32>
    %430 = arith.subf %420, %429 : vector<16x32xf32>
    %431 = arith.mulf %430, %430 : vector<16x32xf32>
    %cst_181 = arith.constant dense<0.000000e+00> : vector<16xf32>
    %432 = vector.multi_reduction <add>, %431, %cst_181 [1] : vector<16x32xf32> to vector<16xf32>
    %433 = vector.shape_cast %432 : vector<16xf32> to vector<16x1xf32>
    %cst_182 = arith.constant 3.200000e+01 : f32
    %434 = vector.broadcast %cst_182 : f32 to vector<16x1xf32>
    %435 = arith.divf %433, %434 : vector<16x1xf32>
    %436 = vector.broadcast %428 : vector<16x1xf32> to vector<16x32xf32>
    %437 = arith.subf %420, %436 : vector<16x32xf32>
    %cst_183 = arith.constant 9.99999974E-6 : f32
    %438 = vector.broadcast %cst_183 : f32 to vector<16x1xf32>
    %439 = arith.addf %435, %438 : vector<16x1xf32>
    %440 = math.rsqrt %439 : vector<16x1xf32>
    %441 = vector.broadcast %440 : vector<16x1xf32> to vector<16x32xf32>
    %442 = arith.mulf %437, %441 : vector<16x32xf32>
    %443 = vector.broadcast %422 : vector<1x32xf32> to vector<16x32xf32>
    %444 = arith.mulf %442, %443 : vector<16x32xf32>
    %445 = vector.broadcast %424 : vector<1x32xf32> to vector<16x32xf32>
    %446 = arith.addf %444, %445 : vector<16x32xf32>
    %447 = vector.shape_cast %446 : vector<16x32xf32> to vector<2x8x32xf32>
    %cst_184 = arith.constant dense<0.000000e+00> : vector<2x32xf32>
    %448 = vector.multi_reduction <add>, %447, %cst_184 [1] : vector<2x8x32xf32> to vector<2x32xf32>
    %cst_185 = arith.constant 8.000000e+00 : f32
    %449 = vector.broadcast %cst_185 : f32 to vector<2x32xf32>
    %450 = arith.divf %448, %449 : vector<2x32xf32>
    %cst_186 = arith.constant dense<0xFF800000> : vector<2x32xf32>
    %451 = vector.multi_reduction <maximumf>, %447, %cst_186 [1] : vector<2x8x32xf32> to vector<2x32xf32>
    %c0_187 = arith.constant 0 : index
    %c0_188 = arith.constant 0 : index
    %452 = vector.load %arg21[%c0_187, %c0_188] : memref<64x5xf32, #tpu.memory_space<vmem>>, vector<32x5xf32>
    %453 = arith.truncf %450 : vector<2x32xf32> to vector<2x32xbf16>
    %454 = arith.truncf %452 : vector<32x5xf32> to vector<32x5xbf16>
    %cst_189 = arith.constant dense<0.000000e+00> : vector<2x5xf32>
    %455 = tpu.matmul %453, %454, %cst_189 {dimension_numbers = #tpu.dot_dimension_numbers<[1], [0], [0], [1], [0, 0, 1, 1], [], []>} : vector<2x32xbf16>, vector<32x5xbf16>, vector<2x5xf32> -> vector<2x5xf32>
    %c32 = arith.constant 32 : index
    %c0_190 = arith.constant 0 : index
    %456 = vector.load %arg21[%c32, %c0_190] : memref<64x5xf32, #tpu.memory_space<vmem>>, vector<32x5xf32>
    %457 = arith.truncf %451 : vector<2x32xf32> to vector<2x32xbf16>
    %458 = arith.truncf %456 : vector<32x5xf32> to vector<32x5xbf16>
    %cst_191 = arith.constant dense<0.000000e+00> : vector<2x5xf32>
    %459 = tpu.matmul %457, %458, %cst_191 {dimension_numbers = #tpu.dot_dimension_numbers<[1], [0], [0], [1], [0, 0, 1, 1], [], []>} : vector<2x32xbf16>, vector<32x5xbf16>, vector<2x5xf32> -> vector<2x5xf32>
    %460 = arith.addf %455, %459 : vector<2x5xf32>
    %c0_192 = arith.constant 0 : index
    %c0_193 = arith.constant 0 : index
    %461 = vector.load %arg22[%c0_192, %c0_193] : memref<1x5xf32, #tpu.memory_space<vmem>>, vector<1x5xf32>
    %462 = vector.broadcast %461 : vector<1x5xf32> to vector<2x5xf32>
    %463 = arith.addf %460, %462 : vector<2x5xf32>
    %c0_194 = arith.constant 0 : index
    %c0_195 = arith.constant 0 : index
    %464 = vector.load %arg23[%c0_194, %c0_195] : memref<2x5xf32, #tpu.memory_space<vmem>>, vector<2x5xf32>
    tpu.vector_store %arg23[%c0_194, %c0_195], %463 {strides = array<i32>} : memref<2x5xf32, #tpu.memory_space<vmem>>, vector<2x5xf32>,
    return
  }
}

</mosaic_0001>

<llo_original>
// kernel: transformer_model_forward.1
$region0: #{transformer_model_forward.1}
  #allocation0 [shape = 'u32[]', space=smem, size = 0x4, offset = 0x4, fixed_abs, tag = 'smem constant byte address 0x4 - core index']
  #allocation1 [shape = 'u32[72,128]{1,0:T(1,128)}', space=vmem, size = 0x9000, scoped, tag = 'internal scratch']
  %s0 = inlined_call_operand.vmem [shape: f32[16,16], index: 0, kind: input, shape index: {}]
  %s1 = inlined_call_operand.vmem [shape: f32[1,32], index: 1, kind: input, shape index: {}]
  %s2 = inlined_call_operand.vmem [shape: f32[16,32], index: 2, kind: input, shape index: {}]
  %s3 = inlined_call_operand.vmem [shape: f32[16,32], index: 3, kind: input, shape index: {}]
  %s4 = inlined_call_operand.hbm [shape: f32[1,32], index: 4, kind: input, shape index: {}]
  %s5 = inlined_call_operand.vmem [shape: f32[2,32,32], index: 5, kind: input, shape index: {}]
  %s6 = inlined_call_operand.hbm [shape: f32[2,1,32], index: 6, kind: input, shape index: {}]
  %s7 = inlined_call_operand.vmem [shape: f32[2,32,32], index: 7, kind: input, shape index: {}]
  %s8 = inlined_call_operand.hbm [shape: f32[2,1,32], index: 8, kind: input, shape index: {}]
  %s9 = inlined_call_operand.vmem [shape: f32[2,32,32], index: 9, kind: input, shape index: {}]
  %s10 = inlined_call_operand.hbm [shape: f32[2,1,32], index: 10, kind: input, shape index: {}]
  %s11 = inlined_call_operand.vmem [shape: f32[2,32,32], index: 11, kind: input, shape index: {}]
  %s12 = inlined_call_operand.vmem [shape: f32[2,1,32], index: 12, kind: input, shape index: {}]
  %s13 = inlined_call_operand.hbm [shape: f32[2,32,64], index: 13, kind: input, shape index: {}]
  %s14 = inlined_call_operand.vmem [shape: f32[2,1,64], index: 14, kind: input, shape index: {}]
  %s15 = inlined_call_operand.vmem [shape: f32[2,64,32], index: 15, kind: input, shape index: {}]
  %s16 = inlined_call_operand.vmem [shape: f32[2,1,32], index: 16, kind: input, shape index: {}]
  %s17 = inlined_call_operand.vmem [shape: f32[2,1,32], index: 17, kind: input, shape index: {}]
  %s18 = inlined_call_operand.hbm [shape: f32[2,1,32], index: 18, kind: input, shape index: {}]
  %s19 = inlined_call_operand.vmem [shape: f32[2,1,32], index: 19, kind: input, shape index: {}]
  %s20 = inlined_call_operand.vmem [shape: f32[2,1,32], index: 20, kind: input, shape index: {}]
  %s21 = inlined_call_operand.vmem [shape: f32[64,5], index: 21, kind: input, shape index: {}]
  %s22 = inlined_call_operand.hbm [shape: f32[1,5], index: 22, kind: input, shape index: {}]
  %s23 = inlined_call_operand.hbm [shape: f32[2,5], index: 23, kind: output, shape index: {}]
  %s24 = sld [smem:[#allocation0]]
  $region130: #{transformer_model_forward.1} parent=0
    _
  %s26 = ssub.s32 1, %s24
  %s27 = scalar_select 0, %s26, %s24
  $region1: #{transformer_model_forward.1} parent=0
    #allocation2 [shape = 'u8[512]{0}', space=vmem, size = 0x400, scoped, tag = 'input window, operand 4, single buffered']
    #allocation3 [shape = 's32[1]{0}', space=sflag, size = 0x4, scoped, tag = 'scoped memory for transformer_model_forward.1']
    #allocation4 [shape = 's32[1]{0}', space=sflag, size = 0x4, scoped, tag = 'scoped memory for transformer_model_forward.1']
    #allocation5 [shape = 'u8[1024]{0}', space=vmem, size = 0x400, scoped, tag = 'input window, operand 6, single buffered']
    #allocation6 [shape = 's32[1]{0}', space=sflag, size = 0x4, scoped, tag = 'scoped memory for transformer_model_forward.1']
    #allocation7 [shape = 'u8[1024]{0}', space=vmem, size = 0x400, scoped, tag = 'input window, operand 8, single buffered']
    #allocation8 [shape = 'u8[1024]{0}', space=vmem, size = 0x400, scoped, tag = 'input window, operand 10, single buffered']
    #allocation9 [shape = 's32[1]{0}', space=sflag, size = 0x4, scoped, tag = 'scoped memory for transformer_model_forward.1']
    #allocation10 [shape = 'u8[32768]{0}', space=vmem, size = 0x8000, scoped, tag = 'input window, operand 13, single buffered']
    #allocation11 [shape = 'u8[1024]{0}', space=vmem, size = 0x400, scoped, tag = 'input window, operand 18, single buffered']
    #allocation12 [shape = 's32[1]{0}', space=sflag, size = 0x4, scoped, tag = 'scoped memory for transformer_model_forward.1']
    #allocation13 [shape = 'u8[512]{0}', space=vmem, size = 0x400, scoped, tag = 'input window, operand 22, single buffered']
    #allocation14 [shape = 'u8[1024]{0}', space=vmem, size = 0x400, scoped, tag = 'output window, operand 0, single buffered']
    %28 = vsyncpa [#allocation3], 0
    %29 = vsyncpa [#allocation6], 0
    %30 = vsyncpa [#allocation9], 0
    %31 = vsyncpa [#allocation12], 0
    %32 = vsyncpa [#allocation4], 0
    // Predicated region
    $region2: #{transformer_model_forward.1} parent=1 // pred_check
      _
    $region3: #{transformer_model_forward.1} parent=1 // pred_check_branch
      %34 = sbr.rel (0) target = $region5
    $region4: #{transformer_model_forward.1} parent=1 // pred_region
      _
    $region5: #{transformer_model_forward.1} parent=1 // pred_fallthru
      _
    // Predicated region
    $region6: #{transformer_model_forward.1} parent=1 // pred_check
      _
    $region7: #{transformer_model_forward.1} parent=1 // pred_check_branch
      %36 = sbr.rel (0) target = $region9
    $region8: #{transformer_model_forward.1} parent=1 // pred_region
      _
    $region9: #{transformer_model_forward.1} parent=1 // pred_fallthru
      _
    // Predicated region
    $region10: #{transformer_model_forward.1} parent=1 // pred_check
      _
    $region11: #{transformer_model_forward.1} parent=1 // pred_check_branch
      %38 = sbr.rel (0) target = $region13
    $region12: #{transformer_model_forward.1} parent=1 // pred_region
      _
    $region13: #{transformer_model_forward.1} parent=1 // pred_fallthru
      _
    // Predicated region
    $region14: #{transformer_model_forward.1} parent=1 // pred_check
      _
    $region15: #{transformer_model_forward.1} parent=1 // pred_check_branch
      %40 = sbr.rel (0) target = $region17
    $region16: #{transformer_model_forward.1} parent=1 // pred_region
      _
    $region17: #{transformer_model_forward.1} parent=1 // pred_fallthru
      _
    // Predicated region
    $region18: #{transformer_model_forward.1} parent=1 // pred_check
      _
    $region19: #{transformer_model_forward.1} parent=1 // pred_check_branch
      %42 = sbr.rel (0) target = $region21
    $region20: #{transformer_model_forward.1} parent=1 // pred_region
      %44 = vsyncadd [#allocation3], 0
      %s46 = sshll.u32 %s4, 4
      %s47 = int_to_ptr.hbm [resolvable:$true] %s46
      %s48 = sshll.u32 [#allocation2], 4
      %s49 = int_to_ptr.vmem [resolvable:$true] %s48
      %51 = dma.hbm_to_vmem [thread:$0]  %s47, 16, %s49, [#allocation3]
    $region21: #{transformer_model_forward.1} parent=1 // pred_fallthru
      _
    // Predicated region
    $region22: #{transformer_model_forward.1} parent=1 // pred_check
      _
    $region23: #{transformer_model_forward.1} parent=1 // pred_check_branch
      %53 = sbr.rel (0) target = $region25
    $region24: #{transformer_model_forward.1} parent=1 // pred_region
      _
    $region25: #{transformer_model_forward.1} parent=1 // pred_fallthru
      _
    // Predicated region
    $region26: #{transformer_model_forward.1} parent=1 // pred_check
      _
    $region27: #{transformer_model_forward.1} parent=1 // pred_check_branch
      %55 = sbr.rel (0) target = $region29
    $region28: #{transformer_model_forward.1} parent=1 // pred_region
      %57 = vsyncadd [#allocation6], 0
      %s58 = sshll.u32 %s6, 4
      %s59 = int_to_ptr.hbm [resolvable:$true] %s58
      %s60 = sshll.u32 [#allocation5], 4
      %s61 = int_to_ptr.vmem [resolvable:$true] %s60
      %66 = dma.hbm_to_vmem [thread:$0]  %s59, 32, %s61, [#allocation6], 16, 16, 1
    $region29: #{transformer_model_forward.1} parent=1 // pred_fallthru
      _
    // Predicated region
    $region30: #{transformer_model_forward.1} parent=1 // pred_check
      _
    $region31: #{transformer_model_forward.1} parent=1 // pred_check_branch
      %68 = sbr.rel (0) target = $region33
    $region32: #{transformer_model_forward.1} parent=1 // pred_region
      _
    $region33: #{transformer_model_forward.1} parent=1 // pred_fallthru
      _
    // Predicated region
    $region34: #{transformer_model_forward.1} parent=1 // pred_check
      _
    $region35: #{transformer_model_forward.1} parent=1 // pred_check_branch
      %70 = sbr.rel (0) target = $region37
    $region36: #{transformer_model_forward.1} parent=1 // pred_region
      %72 = vsyncadd [#allocation6], 0
      %s73 = sshll.u32 %s8, 4
      %s74 = int_to_ptr.hbm [resolvable:$true] %s73
      %s75 = sshll.u32 [#allocation7], 4
      %s76 = int_to_ptr.vmem [resolvable:$true] %s75
      %81 = dma.hbm_to_vmem [thread:$0]  %s74, 32, %s76, [#allocation6], 16, 16, 1
    $region37: #{transformer_model_forward.1} parent=1 // pred_fallthru
      _
    // Predicated region
    $region38: #{transformer_model_forward.1} parent=1 // pred_check
      _
    $region39: #{transformer_model_forward.1} parent=1 // pred_check_branch
      %83 = sbr.rel (0) target = $region41
    $region40: #{transformer_model_forward.1} parent=1 // pred_region
      _
    $region41: #{transformer_model_forward.1} parent=1 // pred_fallthru
      _
    // Predicated region
    $region42: #{transformer_model_forward.1} parent=1 // pred_check
      _
    $region43: #{transformer_model_forward.1} parent=1 // pred_check_branch
      %85 = sbr.rel (0) target = $region45
    $region44: #{transformer_model_forward.1} parent=1 // pred_region
      %87 = vsyncadd [#allocation9], 0
      %s88 = sshll.u32 %s10, 4
      %s89 = int_to_ptr.hbm [resolvable:$true] %s88
      %s90 = sshll.u32 [#allocation8], 4
      %s91 = int_to_ptr.vmem [resolvable:$true] %s90
      %96 = dma.hbm_to_vmem [thread:$0]  %s89, 32, %s91, [#allocation9], 16, 16, 1
    $region45: #{transformer_model_forward.1} parent=1 // pred_fallthru
      _
    // Predicated region
    $region46: #{transformer_model_forward.1} parent=1 // pred_check
      _
    $region47: #{transformer_model_forward.1} parent=1 // pred_check_branch
      %98 = sbr.rel (0) target = $region49
    $region48: #{transformer_model_forward.1} parent=1 // pred_region
      _
    $region49: #{transformer_model_forward.1} parent=1 // pred_fallthru
      _
    // Predicated region
    $region50: #{transformer_model_forward.1} parent=1 // pred_check
      _
    $region51: #{transformer_model_forward.1} parent=1 // pred_check_branch
      %100 = sbr.rel (0) target = $region53
    $region52: #{transformer_model_forward.1} parent=1 // pred_region
      _
    $region53: #{transformer_model_forward.1} parent=1 // pred_fallthru
      _
    // Predicated region
    $region54: #{transformer_model_forward.1} parent=1 // pred_check
      _
    $region55: #{transformer_model_forward.1} parent=1 // pred_check_branch
      %102 = sbr.rel (0) target = $region57
    $region56: #{transformer_model_forward.1} parent=1 // pred_region
      %104 = vsyncadd [#allocation9], 0
      %s105 = sshll.u32 %s13, 4
      %s106 = int_to_ptr.hbm [resolvable:$true] %s105
      %s107 = sshll.u32 [#allocation10], 4
      %s108 = int_to_ptr.vmem [resolvable:$true] %s107
      %113 = dma.hbm_to_vmem [thread:$0]  %s106, 1024, %s108, [#allocation9], 128, 128, 8
    $region57: #{transformer_model_forward.1} parent=1 // pred_fallthru
      _
    // Predicated region
    $region58: #{transformer_model_forward.1} parent=1 // pred_check
      _
    $region59: #{transformer_model_forward.1} parent=1 // pred_check_branch
      %115 = sbr.rel (0) target = $region61
    $region60: #{transformer_model_forward.1} parent=1 // pred_region
      _
    $region61: #{transformer_model_forward.1} parent=1 // pred_fallthru
      _
    // Predicated region
    $region62: #{transformer_model_forward.1} parent=1 // pred_check
      _
    $region63: #{transformer_model_forward.1} parent=1 // pred_check_branch
      %117 = sbr.rel (0) target = $region65
    $region64: #{transformer_model_forward.1} parent=1 // pred_region
      _
    $region65: #{transformer_model_forward.1} parent=1 // pred_fallthru
      _
    // Predicated region
    $region66: #{transformer_model_forward.1} parent=1 // pred_check
      _
    $region67: #{transformer_model_forward.1} parent=1 // pred_check_branch
      %119 = sbr.rel (0) target = $region69
    $region68: #{transformer_model_forward.1} parent=1 // pred_region
      _
    $region69: #{transformer_model_forward.1} parent=1 // pred_fallthru
      _
    // Predicated region
    $region70: #{transformer_model_forward.1} parent=1 // pred_check
      _
    $region71: #{transformer_model_forward.1} parent=1 // pred_check_branch
      %121 = sbr.rel (0) target = $region73
    $region72: #{transformer_model_forward.1} parent=1 // pred_region
      _
    $region73: #{transformer_model_forward.1} parent=1 // pred_fallthru
      _
    // Predicated region
    $region74: #{transformer_model_forward.1} parent=1 // pred_check
      _
    $region75: #{transformer_model_forward.1} parent=1 // pred_check_branch
      %123 = sbr.rel (0) target = $region77
    $region76: #{transformer_model_forward.1} parent=1 // pred_region
      %125 = vsyncadd [#allocation12], 0
      %s126 = sshll.u32 %s18, 4
      %s127 = int_to_ptr.hbm [resolvable:$true] %s126
      %s128 = sshll.u32 [#allocation11], 4
      %s129 = int_to_ptr.vmem [resolvable:$true] %s128
      %134 = dma.hbm_to_vmem [thread:$0]  %s127, 32, %s129, [#allocation12], 16, 16, 1
    $region77: #{transformer_model_forward.1} parent=1 // pred_fallthru
      _
    // Predicated region
    $region78: #{transformer_model_forward.1} parent=1 // pred_check
      _
    $region79: #{transformer_model_forward.1} parent=1 // pred_check_branch
      %136 = sbr.rel (0) target = $region81
    $region80: #{transformer_model_forward.1} parent=1 // pred_region
      _
    $region81: #{transformer_model_forward.1} parent=1 // pred_fallthru
      _
    // Predicated region
    $region82: #{transformer_model_forward.1} parent=1 // pred_check
      _
    $region83: #{transformer_model_forward.1} parent=1 // pred_check_branch
      %138 = sbr.rel (0) target = $region85
    $region84: #{transformer_model_forward.1} parent=1 // pred_region
      _
    $region85: #{transformer_model_forward.1} parent=1 // pred_fallthru
      _
    // Predicated region
    $region86: #{transformer_model_forward.1} parent=1 // pred_check
      _
    $region87: #{transformer_model_forward.1} parent=1 // pred_check_branch
      %140 = sbr.rel (0) target = $region89
    $region88: #{transformer_model_forward.1} parent=1 // pred_region
      _
    $region89: #{transformer_model_forward.1} parent=1 // pred_fallthru
      _
    // Predicated region
    $region90: #{transformer_model_forward.1} parent=1 // pred_check
      _
    $region91: #{transformer_model_forward.1} parent=1 // pred_check_branch
      %142 = sbr.rel (0) target = $region93
    $region92: #{transformer_model_forward.1} parent=1 // pred_region
      %144 = vsyncadd [#allocation12], 0
      %s146 = sshll.u32 %s22, 4
      %s147 = int_to_ptr.hbm [resolvable:$true] %s146
      %s148 = sshll.u32 [#allocation13], 4
      %s149 = int_to_ptr.vmem [resolvable:$true] %s148
      %151 = dma.hbm_to_vmem [thread:$0]  %s147, 16, %s149, [#allocation12]
    $region93: #{transformer_model_forward.1} parent=1 // pred_fallthru
      _
    // Predicated region
    $region94: #{transformer_model_forward.1} parent=1 // pred_check
      _
    $region95: #{transformer_model_forward.1} parent=1 // pred_check_branch
      %153 = sbr.rel (0) target = $region97
    $region96: #{transformer_model_forward.1} parent=1 // pred_region
      %155 = dma.done [#allocation3], 16
    $region97: #{transformer_model_forward.1} parent=1 // pred_fallthru
      _
    // Predicated region
    $region98: #{transformer_model_forward.1} parent=1 // pred_check
      _
    $region99: #{transformer_model_forward.1} parent=1 // pred_check_branch
      %157 = sbr.rel (0) target = $region101
    $region100: #{transformer_model_forward.1} parent=1 // pred_region
      %159 = dma.done [#allocation6], 32
    $region101: #{transformer_model_forward.1} parent=1 // pred_fallthru
      _
    // Predicated region
    $region102: #{transformer_model_forward.1} parent=1 // pred_check
      _
    $region103: #{transformer_model_forward.1} parent=1 // pred_check_branch
      %161 = sbr.rel (0) target = $region105
    $region104: #{transformer_model_forward.1} parent=1 // pred_region
      %163 = dma.done [#allocation6], 32
    $region105: #{transformer_model_forward.1} parent=1 // pred_fallthru
      _
    // Predicated region
    $region106: #{transformer_model_forward.1} parent=1 // pred_check
      _
    $region107: #{transformer_model_forward.1} parent=1 // pred_check_branch
      %165 = sbr.rel (0) target = $region109
    $region108: #{transformer_model_forward.1} parent=1 // pred_region
      %167 = dma.done [#allocation9], 32
    $region109: #{transformer_model_forward.1} parent=1 // pred_fallthru
      _
    // Predicated region
    $region110: #{transformer_model_forward.1} parent=1 // pred_check
      _
    $region111: #{transformer_model_forward.1} parent=1 // pred_check_branch
      %169 = sbr.rel (0) target = $region113
    $region112: #{transformer_model_forward.1} parent=1 // pred_region
      %171 = dma.done [#allocation9], 1024
    $region113: #{transformer_model_forward.1} parent=1 // pred_fallthru
      _
    // Predicated region
    $region114: #{transformer_model_forward.1} parent=1 // pred_check
      _
    $region115: #{transformer_model_forward.1} parent=1 // pred_check_branch
      %173 = sbr.rel (0) target = $region117
    $region116: #{transformer_model_forward.1} parent=1 // pred_region
      %175 = dma.done [#allocation12], 32
    $region117: #{transformer_model_forward.1} parent=1 // pred_fallthru
      _
    // Predicated region
    $region118: #{transformer_model_forward.1} parent=1 // pred_check
      _
    $region119: #{transformer_model_forward.1} parent=1 // pred_check_branch
      %177 = sbr.rel (0) target = $region121
    $region120: #{transformer_model_forward.1} parent=1 // pred_region
      %179 = dma.done [#allocation12], 16
    $region121: #{transformer_model_forward.1} parent=1 // pred_fallthru
      _
    %v181 = vld [vmem:[%s0] sm:$0xff]
    %v182 = vld [vmem:[%s0 + $0x8] sm:$0xff]
    %v183 = vld [vmem:[%s3] sm:$0xff]
    %v184 = vld [vmem:[%s3 + $0x8] sm:$0xff]
    %v185 = vpack.c.bf16 %v182, %v181
    %v186 = vpack.c.bf16 %v184, %v183
    %v187 = vld [vmem:[#allocation2] sm:$0x1]
    %v189 = vperm.slane %v187, 0
    %vm191 = vcmask 130048
    %v193 = vsel %vm191, %v185, 0
    %195 = vmatpush.bf16.msra.mxu0 0
    %196 = vmatpush.bf16.msra.mxu0 0
    %197 = vmatpush.bf16.msra.mxu0 0
    %198 = vmatpush.bf16.msra.mxu0 0
    %199 = vmatpush.bf16.msra.mxu0 0
    %200 = vmatpush.bf16.msra.mxu0 0
    %201 = vmatpush.bf16.msra.mxu0 0
    %202 = vmatpush.bf16.msra.mxu0 %v186
    %203 = vmatmul.bf16.gmra.mxu0 %v193
    %v204 = vpop.f32.mrf.mxu0
    %v205 = vadd.f32 %v189, %v204
    %v206 = vpop.f32.mrf.mxu0
    %v207 = vadd.f32 %v189, %v206
    %208 = vdwg.mxu0
    %v209 = vld [vmem:[%s1] sm:$0x1]
    %v211 = vperm.slane %v209, 0
    %v213 = vmul.f32 %v205, %v211
    %v214 = vmul.f32 %v207, %v211
    %v215 = vld [vmem:[%s2] sm:$0xff]
    %v216 = vld [vmem:[%s2 + $0x8] sm:$0xff]
    %v217 = vadd.f32 %v213, %v215
    %v218 = vadd.f32 %v214, %v216
    %v219 = vld [vmem:[%s5] sm:$0xff]
    %v220 = vld [vmem:[%s5 + $0x8] sm:$0xff]
    %v221 = vld [vmem:[%s5 + $0x10] sm:$0xff]
    %v222 = vld [vmem:[%s5 + $0x18] sm:$0xff]
    %v223 = vpack.c.bf16 %v218, %v217
    %v224 = vpack.c.bf16 %v220, %v219
    %v225 = vpack.c.bf16 %v222, %v221
    %v226 = vld [vmem:[#allocation5] sm:$0x1]
    %v228 = vperm.slane %v226, 0
    %vm230 = vcmask 261120
    %v232 = vsel %vm230, %v223, 0
    %234 = vmatpush.bf16.msra.mxu0 0
    %235 = vmatpush.bf16.msra.mxu0 0
    %236 = vmatpush.bf16.msra.mxu0 0
    %237 = vmatpush.bf16.msra.mxu0 0
    %238 = vmatpush.bf16.msra.mxu0 0
    %239 = vmatpush.bf16.msra.mxu0 0
    %240 = vmatpush.bf16.msra.mxu0 %v225
    %241 = vmatpush.bf16.msra.mxu0 %v224
    %242 = vmatmul.bf16.gmra.mxu0 %v232
    %v243 = vpop.f32.mrf.mxu0
    %v244 = vadd.f32 %v228, %v243
    %v245 = vpop.f32.mrf.mxu0
    %v246 = vadd.f32 %v228, %v245
    %247 = vdwg.mxu0
    %v248 = vld [vmem:[%s7] sm:$0xff]
    %v249 = vld [vmem:[%s7 + $0x8] sm:$0xff]
    %v250 = vld [vmem:[%s7 + $0x10] sm:$0xff]
    %v251 = vld [vmem:[%s7 + $0x18] sm:$0xff]
    %v252 = vpack.c.bf16 %v249, %v248
    %v253 = vpack.c.bf16 %v251, %v250
    %v254 = vld [vmem:[#allocation7] sm:$0x1]
    %v256 = vperm.slane %v254, 0
    %258 = vmatpush.bf16.msra.mxu0 0
    %259 = vmatpush.bf16.msra.mxu0 0
    %260 = vmatpush.bf16.msra.mxu0 0
    %261 = vmatpush.bf16.msra.mxu0 0
    %262 = vmatpush.bf16.msra.mxu0 0
    %263 = vmatpush.bf16.msra.mxu0 0
    %264 = vmatpush.bf16.msra.mxu0 %v253
    %265 = vmatpush.bf16.msra.mxu0 %v252
    %266 = vmatmul.bf16.gmra.mxu0 %v232
    %v267 = vpop.f32.mrf.mxu0
    %v268 = vadd.f32 %v256, %v267
    %v269 = vpop.f32.mrf.mxu0
    %v270 = vadd.f32 %v256, %v269
    %271 = vdwg.mxu0
    %v272 = vld [vmem:[%s9] sm:$0xff]
    %v273 = vld [vmem:[%s9 + $0x8] sm:$0xff]
    %v274 = vld [vmem:[%s9 + $0x10] sm:$0xff]
    %v275 = vld [vmem:[%s9 + $0x18] sm:$0xff]
    %v276 = vpack.c.bf16 %v273, %v272
    %v277 = vpack.c.bf16 %v275, %v274
    %v278 = vld [vmem:[#allocation8] sm:$0x1]
    %v280 = vperm.slane %v278, 0
    %282 = vmatpush.bf16.msra.mxu0 0
    %283 = vmatpush.bf16.msra.mxu0 0
    %284 = vmatpush.bf16.msra.mxu0 0
    %285 = vmatpush.bf16.msra.mxu0 0
    %286 = vmatpush.bf16.msra.mxu0 0
    %287 = vmatpush.bf16.msra.mxu0 0
    %288 = vmatpush.bf16.msra.mxu0 %v277
    %289 = vmatpush.bf16.msra.mxu0 %v276
    %290 = vmatmul.bf16.gmra.mxu0 %v232
    %v291 = vpop.f32.mrf.mxu0
    %v292 = vadd.f32 %v280, %v291
    %v293 = vpop.f32.mrf.mxu0
    %v294 = vadd.f32 %v280, %v293
    %295 = vdwg.mxu0
    %v296 = vld [vmem:[%s11] sm:$0xff]
    %v297 = vld [vmem:[%s11 + $0x8] sm:$0xff]
    %v298 = vld [vmem:[%s11 + $0x10] sm:$0xff]
    %v299 = vld [vmem:[%s11 + $0x18] sm:$0xff]
    %v300 = vld [vmem:[%s12] sm:$0x1]
    %v301 = vpack.c.bf16 %v244, %v244
    %v302 = vpack.c.bf16 %v246, %v246
    %v303 = vpack.c.bf16 %v268, %v268
    %v304 = vpack.c.bf16 %v270, %v270
    %vm305 = vcmask 64512
    %v307 = vsel %vm305, %v301, 0
    %v310 = vsel %vm305, %v303, 0
    %312 = vmatpush.bf16.xpose.msra.mxu0 0
    %313 = vmatpush.bf16.xpose.msra.mxu0 0
    %314 = vmatpush.bf16.xpose.msra.mxu0 0
    %315 = vmatpush.bf16.xpose.msra.mxu0 0
    %316 = vmatpush.bf16.xpose.msra.mxu0 0
    %317 = vmatpush.bf16.xpose.msra.mxu0 0
    %318 = vmatpush.bf16.xpose.msra.mxu0 0
    %319 = vmatpush.bf16.xpose.msra.mxu0 %v310
    %320 = vmatmul.bf16.gmra.mxu0 %v307
    %v321 = vpop.f32.mrf.mxu0
    %v322 = vadd.f32 0.0, %v321
    %v323 = vpop.f32.mrf.mxu0
    %324 = vdwg.mxu0
    %v326 = vsel %vm305, %v302, 0
    %v329 = vsel %vm305, %v304, 0
    %331 = vmatpush.bf16.xpose.msra.mxu0 0
    %332 = vmatpush.bf16.xpose.msra.mxu0 0
    %333 = vmatpush.bf16.xpose.msra.mxu0 0
    %334 = vmatpush.bf16.xpose.msra.mxu0 0
    %335 = vmatpush.bf16.xpose.msra.mxu0 0
    %336 = vmatpush.bf16.xpose.msra.mxu0 0
    %337 = vmatpush.bf16.xpose.msra.mxu0 0
    %338 = vmatpush.bf16.xpose.msra.mxu0 %v329
    %339 = vmatmul.bf16.gmra.mxu0 %v326
    %v340 = vpop.f32.mrf.mxu0
    %v341 = vadd.f32 0.0, %v340
    %v342 = vpop.f32.mrf.mxu0
    %343 = vdwg.mxu0
    %v344 = vmul.f32 %v322, 0.35355338
    %v345 = vmul.f32 %v341, 0.35355338
    %v346 = vsel %vm305, %v344, -inf
    %347 = vmax.xlane.f32.xlu0 %v346
    %v348 = vpop.xlane.xlu0 %347
    %v349 = vsel %vm305, %v345, -inf
    %350 = vmax.xlane.f32.xlu0 %v349
    %v351 = vpop.xlane.xlu0 %350
    %v352 = vsub.f32 %v344, %v348
    %v353 = vsub.f32 %v345, %v351
    %v354 = vmul.f32 %v352, 1.442695
    %v355 = vpow.pop %v354
    %v356 = vmul.f32 %v353, 1.442695
    %v357 = vpow.pop %v356
    %v358 = vsel %vm305, %v355, 0.0
    %359 = vadd.xlane.f32.xlu0 %v358
    %v360 = vpop.xlane.xlu0 %359
    %v361 = vsel %vm305, %v357, 0.0
    %362 = vadd.xlane.f32.xlu0 %v361
    %v363 = vpop.xlane.xlu0 %362
    %v364 = vrcp.pop %v360
    %v365 = vrcp.pop %v363
    %v366 = vmul.f32 %v355, %v364
    %v367 = vmul.f32 %v357, %v365
    %v368 = vpack.c.bf16 %v366, %v366
    %v369 = vpack.c.bf16 %v367, %v367
    %v370 = vpack.c.bf16 %v292, %v292
    %v371 = vpack.c.bf16 %v294, %v294
    %v373 = vsel %vm305, %v368, 0
    %vm375 = vcmask 1043456
    %v377 = vsel %vm375, %v370, 0
    %379 = vmatpush.bf16.msra.mxu0 0
    %380 = vmatpush.bf16.msra.mxu0 0
    %381 = vmatpush.bf16.msra.mxu0 0
    %382 = vmatpush.bf16.msra.mxu0 0
    %383 = vmatpush.bf16.msra.mxu0 0
    %384 = vmatpush.bf16.msra.mxu0 0
    %385 = vmatpush.bf16.msra.mxu0 0
    %386 = vmatpush.bf16.msra.mxu0 %v377
    %387 = vmatmul.bf16.gmra.mxu0 %v373
    %v388 = vpop.f32.mrf.mxu0
    %v389 = vadd.f32 0.0, %v388
    %v390 = vpop.f32.mrf.mxu0
    %391 = vdwg.mxu0
    %v393 = vsel %vm305, %v369, 0
    %v396 = vsel %vm375, %v371, 0
    %398 = vmatpush.bf16.msra.mxu0 0
    %399 = vmatpush.bf16.msra.mxu0 0
    %400 = vmatpush.bf16.msra.mxu0 0
    %401 = vmatpush.bf16.msra.mxu0 0
    %402 = vmatpush.bf16.msra.mxu0 0
    %403 = vmatpush.bf16.msra.mxu0 0
    %404 = vmatpush.bf16.msra.mxu0 0
    %405 = vmatpush.bf16.msra.mxu0 %v396
    %406 = vmatmul.bf16.gmra.mxu0 %v393
    %v407 = vpop.f32.mrf.mxu0
    %v408 = vadd.f32 0.0, %v407
    %v409 = vpop.f32.mrf.mxu0
    %410 = vdwg.mxu0
    %v411 = vpack.c.bf16 %v408, %v389
    %v412 = vpack.c.bf16 %v296, %v296
    %v414 = vsel %vm305, %v411, 0
    %v417 = vsel %vm375, %v412, 0
    %419 = vmatpush.bf16.msra.mxu0 0
    %420 = vmatpush.bf16.msra.mxu0 0
    %421 = vmatpush.bf16.msra.mxu0 0
    %422 = vmatpush.bf16.msra.mxu0 0
    %423 = vmatpush.bf16.msra.mxu0 0
    %424 = vmatpush.bf16.msra.mxu0 0
    %425 = vmatpush.bf16.msra.mxu0 0
    %426 = vmatpush.bf16.msra.mxu0 %v417
    %427 = vmatmul.bf16.gmra.mxu0 %v414
    %v428 = vpop.f32.mrf.mxu0
    %v429 = vadd.f32 0.0, %v428
    %v430 = vpop.f32.mrf.mxu0
    %v431 = vadd.f32 0.0, %v430
    %432 = vdwg.mxu0
    %v434 = vperm.slane %v300, 0
    %v436 = vadd.f32 %v434, %v429
    %v437 = vadd.f32 %v434, %v431
    %v439 = vunpack.c.l.b16 %v301
    %v440 = vpack.c.b16 %v439, %v439
    %441 = vrot.lane.b32.xlu0 %v440, 120
    %v442 = vpop.permute.xlu0 %441
    %v444 = vunpack.c.l.b16 %v303
    %v445 = vpack.c.b16 %v444, %v444
    %446 = vrot.lane.b32.xlu0 %v445, 120
    %v447 = vpop.permute.xlu0 %446
    %v449 = vsel %vm305, %v442, 0
    %v452 = vsel %vm305, %v447, 0
    %454 = vmatpush.bf16.xpose.msra.mxu0 0
    %455 = vmatpush.bf16.xpose.msra.mxu0 0
    %456 = vmatpush.bf16.xpose.msra.mxu0 0
    %457 = vmatpush.bf16.xpose.msra.mxu0 0
    %458 = vmatpush.bf16.xpose.msra.mxu0 0
    %459 = vmatpush.bf16.xpose.msra.mxu0 0
    %460 = vmatpush.bf16.xpose.msra.mxu0 0
    %461 = vmatpush.bf16.xpose.msra.mxu0 %v452
    %462 = vmatmul.bf16.gmra.mxu0 %v449
    %v463 = vpop.f32.mrf.mxu0
    %v464 = vadd.f32 0.0, %v463
    %v465 = vpop.f32.mrf.mxu0
    %466 = vdwg.mxu0
    %v468 = vunpack.c.l.b16 %v302
    %v469 = vpack.c.b16 %v468, %v468
    %470 = vrot.lane.b32.xlu0 %v469, 120
    %v471 = vpop.permute.xlu0 %470
    %v473 = vunpack.c.l.b16 %v304
    %v474 = vpack.c.b16 %v473, %v473
    %475 = vrot.lane.b32.xlu0 %v474, 120
    %v476 = vpop.permute.xlu0 %475
    %v478 = vsel %vm305, %v471, 0
    %v481 = vsel %vm305, %v476, 0
    %483 = vmatpush.bf16.xpose.msra.mxu0 0
    %484 = vmatpush.bf16.xpose.msra.mxu0 0
    %485 = vmatpush.bf16.xpose.msra.mxu0 0
    %486 = vmatpush.bf16.xpose.msra.mxu0 0
    %487 = vmatpush.bf16.xpose.msra.mxu0 0
    %488 = vmatpush.bf16.xpose.msra.mxu0 0
    %489 = vmatpush.bf16.xpose.msra.mxu0 0
    %490 = vmatpush.bf16.xpose.msra.mxu0 %v481
    %491 = vmatmul.bf16.gmra.mxu0 %v478
    %v492 = vpop.f32.mrf.mxu0
    %v493 = vadd.f32 0.0, %v492
    %v494 = vpop.f32.mrf.mxu0
    %495 = vdwg.mxu0
    %v496 = vmul.f32 %v464, 0.35355338
    %v497 = vmul.f32 %v493, 0.35355338
    %v498 = vsel %vm305, %v496, -inf
    %499 = vmax.xlane.f32.xlu0 %v498
    %v500 = vpop.xlane.xlu0 %499
    %v501 = vsel %vm305, %v497, -inf
    %502 = vmax.xlane.f32.xlu0 %v501
    %v503 = vpop.xlane.xlu0 %502
    %v504 = vsub.f32 %v496, %v500
    %v505 = vsub.f32 %v497, %v503
    %v506 = vmul.f32 %v504, 1.442695
    %v507 = vpow.pop %v506
    %v508 = vmul.f32 %v505, 1.442695
    %v509 = vpow.pop %v508
    %v510 = vsel %vm305, %v507, 0.0
    %511 = vadd.xlane.f32.xlu0 %v510
    %v512 = vpop.xlane.xlu0 %511
    %v513 = vsel %vm305, %v509, 0.0
    %514 = vadd.xlane.f32.xlu0 %v513
    %v515 = vpop.xlane.xlu0 %514
    %v516 = vrcp.pop %v512
    %v517 = vrcp.pop %v515
    %v518 = vmul.f32 %v507, %v516
    %v519 = vmul.f32 %v509, %v517
    %v520 = vpack.c.bf16 %v518, %v518
    %v521 = vpack.c.bf16 %v519, %v519
    %v523 = vunpack.c.l.b16 %v370
    %v524 = vpack.c.b16 %v523, %v523
    %525 = vrot.lane.b32.xlu0 %v524, 120
    %v526 = vpop.permute.xlu0 %525
    %v528 = vsel %vm305, %v520, 0
    %v531 = vsel %vm375, %v526, 0
    %533 = vmatpush.bf16.msra.mxu0 0
    %534 = vmatpush.bf16.msra.mxu0 0
    %535 = vmatpush.bf16.msra.mxu0 0
    %536 = vmatpush.bf16.msra.mxu0 0
    %537 = vmatpush.bf16.msra.mxu0 0
    %538 = vmatpush.bf16.msra.mxu0 0
    %539 = vmatpush.bf16.msra.mxu0 0
    %540 = vmatpush.bf16.msra.mxu0 %v531
    %541 = vmatmul.bf16.gmra.mxu0 %v528
    %v542 = vpop.f32.mrf.mxu0
    %v543 = vadd.f32 0.0, %v542
    %v544 = vpop.f32.mrf.mxu0
    %545 = vdwg.mxu0
    %v547 = vunpack.c.l.b16 %v371
    %v548 = vpack.c.b16 %v547, %v547
    %549 = vrot.lane.b32.xlu0 %v548, 120
    %v550 = vpop.permute.xlu0 %549
    %v552 = vsel %vm305, %v521, 0
    %v555 = vsel %vm375, %v550, 0
    %557 = vmatpush.bf16.msra.mxu0 0
    %558 = vmatpush.bf16.msra.mxu0 0
    %559 = vmatpush.bf16.msra.mxu0 0
    %560 = vmatpush.bf16.msra.mxu0 0
    %561 = vmatpush.bf16.msra.mxu0 0
    %562 = vmatpush.bf16.msra.mxu0 0
    %563 = vmatpush.bf16.msra.mxu0 0
    %564 = vmatpush.bf16.msra.mxu0 %v555
    %565 = vmatmul.bf16.gmra.mxu0 %v552
    %v566 = vpop.f32.mrf.mxu0
    %v567 = vadd.f32 0.0, %v566
    %v568 = vpop.f32.mrf.mxu0
    %569 = vdwg.mxu0
    %v570 = vpack.c.bf16 %v567, %v543
    %v571 = vpack.c.bf16 %v297, %v297
    %v573 = vsel %vm305, %v570, 0
    %v576 = vsel %vm375, %v571, 0
    %578 = vmatpush.bf16.msra.mxu0 0
    %579 = vmatpush.bf16.msra.mxu0 0
    %580 = vmatpush.bf16.msra.mxu0 0
    %581 = vmatpush.bf16.msra.mxu0 0
    %582 = vmatpush.bf16.msra.mxu0 0
    %583 = vmatpush.bf16.msra.mxu0 0
    %584 = vmatpush.bf16.msra.mxu0 0
    %585 = vmatpush.bf16.msra.mxu0 %v576
    %586 = vmatmul.bf16.gmra.mxu0 %v573
    %v587 = vpop.f32.mrf.mxu0
    %v588 = vadd.f32 0.0, %v587
    %v589 = vpop.f32.mrf.mxu0
    %v590 = vadd.f32 0.0, %v589
    %591 = vdwg.mxu0
    %v592 = vadd.f32 %v436, %v588
    %v593 = vadd.f32 %v437, %v590
    %594 = vrot.lane.b32.xlu0 %v440, 112
    %v595 = vpop.permute.xlu0 %594
    %596 = vrot.lane.b32.xlu0 %v445, 112
    %v597 = vpop.permute.xlu0 %596
    %v599 = vsel %vm305, %v595, 0
    %v602 = vsel %vm305, %v597, 0
    %604 = vmatpush.bf16.xpose.msra.mxu0 0
    %605 = vmatpush.bf16.xpose.msra.mxu0 0
    %606 = vmatpush.bf16.xpose.msra.mxu0 0
    %607 = vmatpush.bf16.xpose.msra.mxu0 0
    %608 = vmatpush.bf16.xpose.msra.mxu0 0
    %609 = vmatpush.bf16.xpose.msra.mxu0 0
    %610 = vmatpush.bf16.xpose.msra.mxu0 0
    %611 = vmatpush.bf16.xpose.msra.mxu0 %v602
    %612 = vmatmul.bf16.gmra.mxu0 %v599
    %v613 = vpop.f32.mrf.mxu0
    %v614 = vadd.f32 0.0, %v613
    %v615 = vpop.f32.mrf.mxu0
    %616 = vdwg.mxu0
    %617 = vrot.lane.b32.xlu0 %v469, 112
    %v618 = vpop.permute.xlu0 %617
    %619 = vrot.lane.b32.xlu0 %v474, 112
    %v620 = vpop.permute.xlu0 %619
    %v622 = vsel %vm305, %v618, 0
    %v625 = vsel %vm305, %v620, 0
    %627 = vmatpush.bf16.xpose.msra.mxu0 0
    %628 = vmatpush.bf16.xpose.msra.mxu0 0
    %629 = vmatpush.bf16.xpose.msra.mxu0 0
    %630 = vmatpush.bf16.xpose.msra.mxu0 0
    %631 = vmatpush.bf16.xpose.msra.mxu0 0
    %632 = vmatpush.bf16.xpose.msra.mxu0 0
    %633 = vmatpush.bf16.xpose.msra.mxu0 0
    %634 = vmatpush.bf16.xpose.msra.mxu0 %v625
    %635 = vmatmul.bf16.gmra.mxu0 %v622
    %v636 = vpop.f32.mrf.mxu0
    %v637 = vadd.f32 0.0, %v636
    %v638 = vpop.f32.mrf.mxu0
    %639 = vdwg.mxu0
    %v640 = vmul.f32 %v614, 0.35355338
    %v641 = vmul.f32 %v637, 0.35355338
    %v642 = vsel %vm305, %v640, -inf
    %643 = vmax.xlane.f32.xlu0 %v642
    %v644 = vpop.xlane.xlu0 %643
    %v645 = vsel %vm305, %v641, -inf
    %646 = vmax.xlane.f32.xlu0 %v645
    %v647 = vpop.xlane.xlu0 %646
    %v648 = vsub.f32 %v640, %v644
    %v649 = vsub.f32 %v641, %v647
    %v650 = vmul.f32 %v648, 1.442695
    %v651 = vpow.pop %v650
    %v652 = vmul.f32 %v649, 1.442695
    %v653 = vpow.pop %v652
    %v654 = vsel %vm305, %v651, 0.0
    %655 = vadd.xlane.f32.xlu0 %v654
    %v656 = vpop.xlane.xlu0 %655
    %v657 = vsel %vm305, %v653, 0.0
    %658 = vadd.xlane.f32.xlu0 %v657
    %v659 = vpop.xlane.xlu0 %658
    %v660 = vrcp.pop %v656
    %v661 = vrcp.pop %v659
    %v662 = vmul.f32 %v651, %v660
    %v663 = vmul.f32 %v653, %v661
    %v664 = vpack.c.bf16 %v662, %v662
    %v665 = vpack.c.bf16 %v663, %v663
    %666 = vrot.lane.b32.xlu0 %v524, 112
    %v667 = vpop.permute.xlu0 %666
    %v669 = vsel %vm305, %v664, 0
    %v672 = vsel %vm375, %v667, 0
    %674 = vmatpush.bf16.msra.mxu0 0
    %675 = vmatpush.bf16.msra.mxu0 0
    %676 = vmatpush.bf16.msra.mxu0 0
    %677 = vmatpush.bf16.msra.mxu0 0
    %678 = vmatpush.bf16.msra.mxu0 0
    %679 = vmatpush.bf16.msra.mxu0 0
    %680 = vmatpush.bf16.msra.mxu0 0
    %681 = vmatpush.bf16.msra.mxu0 %v672
    %682 = vmatmul.bf16.gmra.mxu0 %v669
    %v683 = vpop.f32.mrf.mxu0
    %v684 = vadd.f32 0.0, %v683
    %v685 = vpop.f32.mrf.mxu0
    %686 = vdwg.mxu0
    %687 = vrot.lane.b32.xlu0 %v548, 112
    %v688 = vpop.permute.xlu0 %687
    %v690 = vsel %vm305, %v665, 0
    %v693 = vsel %vm375, %v688, 0
    %695 = vmatpush.bf16.msra.mxu0 0
    %696 = vmatpush.bf16.msra.mxu0 0
    %697 = vmatpush.bf16.msra.mxu0 0
    %698 = vmatpush.bf16.msra.mxu0 0
    %699 = vmatpush.bf16.msra.mxu0 0
    %700 = vmatpush.bf16.msra.mxu0 0
    %701 = vmatpush.bf16.msra.mxu0 0
    %702 = vmatpush.bf16.msra.mxu0 %v693
    %703 = vmatmul.bf16.gmra.mxu0 %v690
    %v704 = vpop.f32.mrf.mxu0
    %v705 = vadd.f32 0.0, %v704
    %v706 = vpop.f32.mrf.mxu0
    %707 = vdwg.mxu0
    %v708 = vpack.c.bf16 %v705, %v684
    %v709 = vpack.c.bf16 %v298, %v298
    %v711 = vsel %vm305, %v708, 0
    %v714 = vsel %vm375, %v709, 0
    %716 = vmatpush.bf16.msra.mxu0 0
    %717 = vmatpush.bf16.msra.mxu0 0
    %718 = vmatpush.bf16.msra.mxu0 0
    %719 = vmatpush.bf16.msra.mxu0 0
    %720 = vmatpush.bf16.msra.mxu0 0
    %721 = vmatpush.bf16.msra.mxu0 0
    %722 = vmatpush.bf16.msra.mxu0 0
    %723 = vmatpush.bf16.msra.mxu0 %v714
    %724 = vmatmul.bf16.gmra.mxu0 %v711
    %v725 = vpop.f32.mrf.mxu0
    %v726 = vadd.f32 0.0, %v725
    %v727 = vpop.f32.mrf.mxu0
    %v728 = vadd.f32 0.0, %v727
    %729 = vdwg.mxu0
    %v730 = vadd.f32 %v592, %v726
    %v731 = vadd.f32 %v593, %v728
    %732 = vrot.lane.b32.xlu0 %v440, 104
    %v733 = vpop.permute.xlu0 %732
    %734 = vrot.lane.b32.xlu0 %v445, 104
    %v735 = vpop.permute.xlu0 %734
    %v737 = vsel %vm305, %v733, 0
    %v740 = vsel %vm305, %v735, 0
    %742 = vmatpush.bf16.xpose.msra.mxu0 0
    %743 = vmatpush.bf16.xpose.msra.mxu0 0
    %744 = vmatpush.bf16.xpose.msra.mxu0 0
    %745 = vmatpush.bf16.xpose.msra.mxu0 0
    %746 = vmatpush.bf16.xpose.msra.mxu0 0
    %747 = vmatpush.bf16.xpose.msra.mxu0 0
    %748 = vmatpush.bf16.xpose.msra.mxu0 0
    %749 = vmatpush.bf16.xpose.msra.mxu0 %v740
    %750 = vmatmul.bf16.gmra.mxu0 %v737
    %v751 = vpop.f32.mrf.mxu0
    %v752 = vadd.f32 0.0, %v751
    %v753 = vpop.f32.mrf.mxu0
    %754 = vdwg.mxu0
    %755 = vrot.lane.b32.xlu0 %v469, 104
    %v756 = vpop.permute.xlu0 %755
    %757 = vrot.lane.b32.xlu0 %v474, 104
    %v758 = vpop.permute.xlu0 %757
    %v760 = vsel %vm305, %v756, 0
    %v763 = vsel %vm305, %v758, 0
    %765 = vmatpush.bf16.xpose.msra.mxu0 0
    %766 = vmatpush.bf16.xpose.msra.mxu0 0
    %767 = vmatpush.bf16.xpose.msra.mxu0 0
    %768 = vmatpush.bf16.xpose.msra.mxu0 0
    %769 = vmatpush.bf16.xpose.msra.mxu0 0
    %770 = vmatpush.bf16.xpose.msra.mxu0 0
    %771 = vmatpush.bf16.xpose.msra.mxu0 0
    %772 = vmatpush.bf16.xpose.msra.mxu0 %v763
    %773 = vmatmul.bf16.gmra.mxu0 %v760
    %v774 = vpop.f32.mrf.mxu0
    %v775 = vadd.f32 0.0, %v774
    %v776 = vpop.f32.mrf.mxu0
    %777 = vdwg.mxu0
    %v778 = vmul.f32 %v752, 0.35355338
    %v779 = vmul.f32 %v775, 0.35355338
    %v780 = vsel %vm305, %v778, -inf
    %781 = vmax.xlane.f32.xlu0 %v780
    %v782 = vpop.xlane.xlu0 %781
    %v783 = vsel %vm305, %v779, -inf
    %784 = vmax.xlane.f32.xlu0 %v783
    %v785 = vpop.xlane.xlu0 %784
    %v786 = vsub.f32 %v778, %v782
    %v787 = vsub.f32 %v779, %v785
    %v788 = vmul.f32 %v786, 1.442695
    %v789 = vpow.pop %v788
    %v790 = vmul.f32 %v787, 1.442695
    %v791 = vpow.pop %v790
    %v792 = vsel %vm305, %v789, 0.0
    %793 = vadd.xlane.f32.xlu0 %v792
    %v794 = vpop.xlane.xlu0 %793
    %v795 = vsel %vm305, %v791, 0.0
    %796 = vadd.xlane.f32.xlu0 %v795
    %v797 = vpop.xlane.xlu0 %796
    %v798 = vrcp.pop %v794
    %v799 = vrcp.pop %v797
    %v800 = vmul.f32 %v789, %v798
    %v801 = vmul.f32 %v791, %v799
    %v802 = vpack.c.bf16 %v800, %v800
    %v803 = vpack.c.bf16 %v801, %v801
    %804 = vrot.lane.b32.xlu0 %v524, 104
    %v805 = vpop.permute.xlu0 %804
    %v807 = vsel %vm305, %v802, 0
    %v810 = vsel %vm375, %v805, 0
    %812 = vmatpush.bf16.msra.mxu0 0
    %813 = vmatpush.bf16.msra.mxu0 0
    %814 = vmatpush.bf16.msra.mxu0 0
    %815 = vmatpush.bf16.msra.mxu0 0
    %816 = vmatpush.bf16.msra.mxu0 0
    %817 = vmatpush.bf16.msra.mxu0 0
    %818 = vmatpush.bf16.msra.mxu0 0
    %819 = vmatpush.bf16.msra.mxu0 %v810
    %820 = vmatmul.bf16.gmra.mxu0 %v807
    %v821 = vpop.f32.mrf.mxu0
    %v822 = vadd.f32 0.0, %v821
    %v823 = vpop.f32.mrf.mxu0
    %824 = vdwg.mxu0
    %825 = vrot.lane.b32.xlu0 %v548, 104
    %v826 = vpop.permute.xlu0 %825
    %v828 = vsel %vm305, %v803, 0
    %v831 = vsel %vm375, %v826, 0
    %833 = vmatpush.bf16.msra.mxu0 0
    %834 = vmatpush.bf16.msra.mxu0 0
    %835 = vmatpush.bf16.msra.mxu0 0
    %836 = vmatpush.bf16.msra.mxu0 0
    %837 = vmatpush.bf16.msra.mxu0 0
    %838 = vmatpush.bf16.msra.mxu0 0
    %839 = vmatpush.bf16.msra.mxu0 0
    %840 = vmatpush.bf16.msra.mxu0 %v831
    %841 = vmatmul.bf16.gmra.mxu0 %v828
    %v842 = vpop.f32.mrf.mxu0
    %v843 = vadd.f32 0.0, %v842
    %v844 = vpop.f32.mrf.mxu0
    %845 = vdwg.mxu0
    %v846 = vpack.c.bf16 %v843, %v822
    %v847 = vpack.c.bf16 %v299, %v299
    %v849 = vsel %vm305, %v846, 0
    %v852 = vsel %vm375, %v847, 0
    %854 = vmatpush.bf16.msra.mxu0 0
    %855 = vmatpush.bf16.msra.mxu0 0
    %856 = vmatpush.bf16.msra.mxu0 0
    %857 = vmatpush.bf16.msra.mxu0 0
    %858 = vmatpush.bf16.msra.mxu0 0
    %859 = vmatpush.bf16.msra.mxu0 0
    %860 = vmatpush.bf16.msra.mxu0 0
    %861 = vmatpush.bf16.msra.mxu0 %v852
    %862 = vmatmul.bf16.gmra.mxu0 %v849
    %v863 = vpop.f32.mrf.mxu0
    %v864 = vadd.f32 0.0, %v863
    %v865 = vpop.f32.mrf.mxu0
    %v866 = vadd.f32 0.0, %v865
    %867 = vdwg.mxu0
    %v868 = vadd.f32 %v730, %v864
    %v869 = vadd.f32 %v731, %v866
    %v870 = vadd.f32 %v217, %v868
    %v871 = vadd.f32 %v218, %v869
    %v872 = vld [vmem:[%s17] sm:$0x1]
    %v873 = vld [vmem:[#allocation11] sm:$0x1]
    %v874 = vsel %vm230, %v870, 0.0
    %875 = vadd.xlane.f32.xlu0 %v874
    %v876 = vpop.xlane.xlu0 %875
    %v877 = vsel %vm230, %v871, 0.0
    %878 = vadd.xlane.f32.xlu0 %v877
    %v879 = vpop.xlane.xlu0 %878
    %v880 = vrcp.pop 32.0
    %v881 = vmul.f32 32.0, %v880
    %v882 = vsub.f32 1.0, %v881
    %v883 = vmul.f32 %v880, %v882
    %v884 = vadd.f32 %v880, %v883
    %vm885 = vweird.f32 %v880
    %v886 = vsel %vm885, %v880, %v884
    %v887 = vmul.f32 %v876, %v886
    %v888 = vmul.f32 %v879, %v886
    %v889 = vsub.f32 %v870, %v887
    %v890 = vsub.f32 %v871, %v888
    %v891 = vmul.f32 %v889, %v889
    %v892 = vmul.f32 %v890, %v890
    %v893 = vsel %vm230, %v891, 0.0
    %894 = vadd.xlane.f32.xlu0 %v893
    %v895 = vpop.xlane.xlu0 %894
    %v896 = vsel %vm230, %v892, 0.0
    %897 = vadd.xlane.f32.xlu0 %v896
    %v898 = vpop.xlane.xlu0 %897
    %v899 = vmul.f32 %v895, %v886
    %v900 = vmul.f32 %v898, %v886
    %v901 = vadd.f32 %v899, 1e-05
    %v902 = vadd.f32 %v900, 1e-05
    %v903 = vrsqrt.pop %v901
    %v904 = vmul.f32 %v903, %v901
    %v905 = vmul.f32 %v904, %v903
    %v906 = vmul.f32 0.5, %v905
    %v907 = vsub.f32 1.5, %v906
    %v908 = vmul.f32 %v903, %v907
    %vm909 = vweird.f32 %v901
    %vm910 = vweird.f32 %v903
    %vm911 = vmor %vm909, %vm910
    %v912 = vsel %vm911, %v903, %v908
    %v913 = vrsqrt.pop %v902
    %v914 = vmul.f32 %v913, %v902
    %v915 = vmul.f32 %v914, %v913
    %v916 = vmul.f32 0.5, %v915
    %v917 = vsub.f32 1.5, %v916
    %v918 = vmul.f32 %v913, %v917
    %vm919 = vweird.f32 %v902
    %vm920 = vweird.f32 %v913
    %vm921 = vmor %vm919, %vm920
    %v922 = vsel %vm921, %v913, %v918
    %v923 = vmul.f32 %v889, %v912
    %v924 = vmul.f32 %v890, %v922
    %v926 = vperm.slane %v872, 0
    %v928 = vmul.f32 %v923, %v926
    %v929 = vmul.f32 %v924, %v926
    %v931 = vperm.slane %v873, 0
    %v933 = vadd.f32 %v928, %v931
    %v934 = vadd.f32 %v929, %v931
    %v935 = vld [vmem:[#allocation10] sm:$0xff]
    %v936 = vld [vmem:[#allocation10 + $0x8] sm:$0xff]
    %v937 = vld [vmem:[#allocation10 + $0x10] sm:$0xff]
    %v938 = vld [vmem:[#allocation10 + $0x18] sm:$0xff]
    %v939 = vpack.c.bf16 %v934, %v933
    %v940 = vpack.c.bf16 %v936, %v935
    %v941 = vpack.c.bf16 %v938, %v937
    %v942 = vld [vmem:[%s14] sm:$0x1]
    %v944 = vperm.slane %v942, 0
    %v947 = vsel %vm230, %v939, 0
    %949 = vmatpush.bf16.msra.mxu0 0
    %950 = vmatpush.bf16.msra.mxu0 0
    %951 = vmatpush.bf16.msra.mxu0 0
    %952 = vmatpush.bf16.msra.mxu0 0
    %953 = vmatpush.bf16.msra.mxu0 0
    %954 = vmatpush.bf16.msra.mxu0 0
    %955 = vmatpush.bf16.msra.mxu0 %v941
    %956 = vmatpush.bf16.msra.mxu0 %v940
    %957 = vmatmul.bf16.gmra.mxu0 %v947
    %v958 = vpop.f32.mrf.mxu0
    %v959 = vadd.f32 %v944, %v958
    %v960 = vpop.f32.mrf.mxu0
    %v961 = vadd.f32 %v944, %v960
    %962 = vdwg.mxu0
    %v963 = vmax.f32 %v959, 0.0
    %v964 = vmax.f32 %v961, 0.0
    %v965 = vld [vmem:[%s15] sm:$0xff]
    %v966 = vld [vmem:[%s15 + $0x8] sm:$0xff]
    %v967 = vld [vmem:[%s15 + $0x10] sm:$0xff]
    %v968 = vld [vmem:[%s15 + $0x18] sm:$0xff]
    %v969 = vld [vmem:[%s15 + $0x20] sm:$0xff]
    %v970 = vld [vmem:[%s15 + $0x28] sm:$0xff]
    %v971 = vld [vmem:[%s15 + $0x30] sm:$0xff]
    %v972 = vld [vmem:[%s15 + $0x38] sm:$0xff]
    %v973 = vpack.c.bf16 %v964, %v963
    %v974 = vpack.c.bf16 %v966, %v965
    %v975 = vpack.c.bf16 %v968, %v967
    %v976 = vpack.c.bf16 %v970, %v969
    %v977 = vpack.c.bf16 %v972, %v971
    %v978 = vld [vmem:[%s16] sm:$0x1]
    %v980 = vperm.slane %v978, 0
    %vm982 = vcmask 523264
    %v984 = vsel %vm982, %v973, 0
    %986 = vmatpush.bf16.msra.mxu0 0
    %987 = vmatpush.bf16.msra.mxu0 0
    %988 = vmatpush.bf16.msra.mxu0 0
    %989 = vmatpush.bf16.msra.mxu0 0
    %990 = vmatpush.bf16.msra.mxu0 %v977
    %991 = vmatpush.bf16.msra.mxu0 %v976
    %992 = vmatpush.bf16.msra.mxu0 %v975
    %993 = vmatpush.bf16.msra.mxu0 %v974
    %994 = vmatmul.bf16.gmra.mxu0 %v984
    %v995 = vpop.f32.mrf.mxu0
    %v996 = vadd.f32 %v980, %v995
    %v997 = vpop.f32.mrf.mxu0
    %v998 = vadd.f32 %v980, %v997
    %999 = vdwg.mxu0
    %v1000 = vadd.f32 %v933, %v996
    %v1001 = vadd.f32 %v934, %v998
    %v1002 = vld [vmem:[%s19] sm:$0x1]
    %v1003 = vld [vmem:[%s20] sm:$0x1]
    %v1004 = vsel %vm230, %v1000, 0.0
    %1005 = vadd.xlane.f32.xlu0 %v1004
    %v1006 = vpop.xlane.xlu0 %1005
    %v1007 = vsel %vm230, %v1001, 0.0
    %1008 = vadd.xlane.f32.xlu0 %v1007
    %v1009 = vpop.xlane.xlu0 %1008
    %v1010 = vmul.f32 %v1006, %v886
    %v1011 = vmul.f32 %v1009, %v886
    %v1012 = vsub.f32 %v1000, %v1010
    %v1013 = vsub.f32 %v1001, %v1011
    %v1014 = vmul.f32 %v1012, %v1012
    %v1015 = vmul.f32 %v1013, %v1013
    %v1016 = vsel %vm230, %v1014, 0.0
    %1017 = vadd.xlane.f32.xlu0 %v1016
    %v1018 = vpop.xlane.xlu0 %1017
    %v1019 = vsel %vm230, %v1015, 0.0
    %1020 = vadd.xlane.f32.xlu0 %v1019
    %v1021 = vpop.xlane.xlu0 %1020
    %v1022 = vmul.f32 %v1018, %v886
    %v1023 = vmul.f32 %v1021, %v886
    %v1024 = vadd.f32 %v1022, 1e-05
    %v1025 = vadd.f32 %v1023, 1e-05
    %v1026 = vrsqrt.pop %v1024
    %v1027 = vmul.f32 %v1026, %v1024
    %v1028 = vmul.f32 %v1027, %v1026
    %v1029 = vmul.f32 0.5, %v1028
    %v1030 = vsub.f32 1.5, %v1029
    %v1031 = vmul.f32 %v1026, %v1030
    %vm1032 = vweird.f32 %v1024
    %vm1033 = vweird.f32 %v1026
    %vm1034 = vmor %vm1032, %vm1033
    %v1035 = vsel %vm1034, %v1026, %v1031
    %v1036 = vrsqrt.pop %v1025
    %v1037 = vmul.f32 %v1036, %v1025
    %v1038 = vmul.f32 %v1037, %v1036
    %v1039 = vmul.f32 0.5, %v1038
    %v1040 = vsub.f32 1.5, %v1039
    %v1041 = vmul.f32 %v1036, %v1040
    %vm1042 = vweird.f32 %v1025
    %vm1043 = vweird.f32 %v1036
    %vm1044 = vmor %vm1042, %vm1043
    %v1045 = vsel %vm1044, %v1036, %v1041
    %v1046 = vmul.f32 %v1012, %v1035
    %v1047 = vmul.f32 %v1013, %v1045
    %v1049 = vperm.slane %v1002, 0
    %v1051 = vmul.f32 %v1046, %v1049
    %v1052 = vmul.f32 %v1047, %v1049
    %v1054 = vperm.slane %v1003, 0
    %v1056 = vadd.f32 %v1051, %v1054
    %v1057 = vadd.f32 %v1052, %v1054
    %s1058 = scalar_lea.vmem %s5, 32
    %v1059 = vld [vmem:[%s1058] sm:$0xff]
    %v1060 = vld [vmem:[%s1058 + $0x8] sm:$0xff]
    %v1061 = vld [vmem:[%s1058 + $0x10] sm:$0xff]
    %v1062 = vld [vmem:[%s1058 + $0x18] sm:$0xff]
    %v1063 = vpack.c.bf16 %v1057, %v1056
    %v1064 = vpack.c.bf16 %v1060, %v1059
    %v1065 = vpack.c.bf16 %v1062, %v1061
    %s1066 = scalar_lea.vmem [#allocation5], 1
    %v1067 = vld [vmem:[%s1066] sm:$0x1]
    %v1069 = vperm.slane %v1067, 0
    %v1072 = vsel %vm230, %v1063, 0
    %1074 = vmatpush.bf16.msra.mxu0 0
    %1075 = vmatpush.bf16.msra.mxu0 0
    %1076 = vmatpush.bf16.msra.mxu0 0
    %1077 = vmatpush.bf16.msra.mxu0 0
    %1078 = vmatpush.bf16.msra.mxu0 0
    %1079 = vmatpush.bf16.msra.mxu0 0
    %1080 = vmatpush.bf16.msra.mxu0 %v1065
    %1081 = vmatpush.bf16.msra.mxu0 %v1064
    %1082 = vmatmul.bf16.gmra.mxu0 %v1072
    %v1083 = vpop.f32.mrf.mxu0
    %v1084 = vadd.f32 %v1069, %v1083
    %v1085 = vpop.f32.mrf.mxu0
    %v1086 = vadd.f32 %v1069, %v1085
    %1087 = vdwg.mxu0
    %s1088 = scalar_lea.vmem %s7, 32
    %v1089 = vld [vmem:[%s1088] sm:$0xff]
    %v1090 = vld [vmem:[%s1088 + $0x8] sm:$0xff]
    %v1091 = vld [vmem:[%s1088 + $0x10] sm:$0xff]
    %v1092 = vld [vmem:[%s1088 + $0x18] sm:$0xff]
    %v1093 = vpack.c.bf16 %v1090, %v1089
    %v1094 = vpack.c.bf16 %v1092, %v1091
    %s1095 = scalar_lea.vmem [#allocation7], 1
    %v1096 = vld [vmem:[%s1095] sm:$0x1]
    %v1098 = vperm.slane %v1096, 0
    %1100 = vmatpush.bf16.msra.mxu0 0
    %1101 = vmatpush.bf16.msra.mxu0 0
    %1102 = vmatpush.bf16.msra.mxu0 0
    %1103 = vmatpush.bf16.msra.mxu0 0
    %1104 = vmatpush.bf16.msra.mxu0 0
    %1105 = vmatpush.bf16.msra.mxu0 0
    %1106 = vmatpush.bf16.msra.mxu0 %v1094
    %1107 = vmatpush.bf16.msra.mxu0 %v1093
    %1108 = vmatmul.bf16.gmra.mxu0 %v1072
    %v1109 = vpop.f32.mrf.mxu0
    %v1110 = vadd.f32 %v1098, %v1109
    %v1111 = vpop.f32.mrf.mxu0
    %v1112 = vadd.f32 %v1098, %v1111
    %1113 = vdwg.mxu0
    %s1114 = scalar_lea.vmem %s9, 32
    %v1115 = vld [vmem:[%s1114] sm:$0xff]
    %v1116 = vld [vmem:[%s1114 + $0x8] sm:$0xff]
    %v1117 = vld [vmem:[%s1114 + $0x10] sm:$0xff]
    %v1118 = vld [vmem:[%s1114 + $0x18] sm:$0xff]
    %v1119 = vpack.c.bf16 %v1116, %v1115
    %v1120 = vpack.c.bf16 %v1118, %v1117
    %s1121 = scalar_lea.vmem [#allocation8], 1
    %v1122 = vld [vmem:[%s1121] sm:$0x1]
    %v1124 = vperm.slane %v1122, 0
    %1126 = vmatpush.bf16.msra.mxu0 0
    %1127 = vmatpush.bf16.msra.mxu0 0
    %1128 = vmatpush.bf16.msra.mxu0 0
    %1129 = vmatpush.bf16.msra.mxu0 0
    %1130 = vmatpush.bf16.msra.mxu0 0
    %1131 = vmatpush.bf16.msra.mxu0 0
    %1132 = vmatpush.bf16.msra.mxu0 %v1120
    %1133 = vmatpush.bf16.msra.mxu0 %v1119
    %1134 = vmatmul.bf16.gmra.mxu0 %v1072
    %v1135 = vpop.f32.mrf.mxu0
    %v1136 = vadd.f32 %v1124, %v1135
    %v1137 = vpop.f32.mrf.mxu0
    %v1138 = vadd.f32 %v1124, %v1137
    %1139 = vdwg.mxu0
    %s1140 = scalar_lea.vmem %s11, 32
    %v1141 = vld [vmem:[%s1140] sm:$0xff]
    %v1142 = vld [vmem:[%s1140 + $0x8] sm:$0xff]
    %v1143 = vld [vmem:[%s1140 + $0x10] sm:$0xff]
    %v1144 = vld [vmem:[%s1140 + $0x18] sm:$0xff]
    %s1145 = scalar_lea.vmem %s12, 1
    %v1146 = vld [vmem:[%s1145] sm:$0x1]
    %v1147 = vpack.c.bf16 %v1084, %v1084
    %v1148 = vpack.c.bf16 %v1086, %v1086
    %v1149 = vpack.c.bf16 %v1110, %v1110
    %v1150 = vpack.c.bf16 %v1112, %v1112
    %v1152 = vsel %vm305, %v1147, 0
    %v1155 = vsel %vm305, %v1149, 0
    %1157 = vmatpush.bf16.xpose.msra.mxu0 0
    %1158 = vmatpush.bf16.xpose.msra.mxu0 0
    %1159 = vmatpush.bf16.xpose.msra.mxu0 0
    %1160 = vmatpush.bf16.xpose.msra.mxu0 0
    %1161 = vmatpush.bf16.xpose.msra.mxu0 0
    %1162 = vmatpush.bf16.xpose.msra.mxu0 0
    %1163 = vmatpush.bf16.xpose.msra.mxu0 0
    %1164 = vmatpush.bf16.xpose.msra.mxu0 %v1155
    %1165 = vmatmul.bf16.gmra.mxu0 %v1152
    %v1166 = vpop.f32.mrf.mxu0
    %v1167 = vadd.f32 0.0, %v1166
    %v1168 = vpop.f32.mrf.mxu0
    %1169 = vdwg.mxu0
    %v1171 = vsel %vm305, %v1148, 0
    %v1174 = vsel %vm305, %v1150, 0
    %1176 = vmatpush.bf16.xpose.msra.mxu0 0
    %1177 = vmatpush.bf16.xpose.msra.mxu0 0
    %1178 = vmatpush.bf16.xpose.msra.mxu0 0
    %1179 = vmatpush.bf16.xpose.msra.mxu0 0
    %1180 = vmatpush.bf16.xpose.msra.mxu0 0
    %1181 = vmatpush.bf16.xpose.msra.mxu0 0
    %1182 = vmatpush.bf16.xpose.msra.mxu0 0
    %1183 = vmatpush.bf16.xpose.msra.mxu0 %v1174
    %1184 = vmatmul.bf16.gmra.mxu0 %v1171
    %v1185 = vpop.f32.mrf.mxu0
    %v1186 = vadd.f32 0.0, %v1185
    %v1187 = vpop.f32.mrf.mxu0
    %1188 = vdwg.mxu0
    %v1189 = vmul.f32 %v1167, 0.35355338
    %v1190 = vmul.f32 %v1186, 0.35355338
    %v1191 = vsel %vm305, %v1189, -inf
    %1192 = vmax.xlane.f32.xlu0 %v1191
    %v1193 = vpop.xlane.xlu0 %1192
    %v1194 = vsel %vm305, %v1190, -inf
    %1195 = vmax.xlane.f32.xlu0 %v1194
    %v1196 = vpop.xlane.xlu0 %1195
    %v1197 = vsub.f32 %v1189, %v1193
    %v1198 = vsub.f32 %v1190, %v1196
    %v1199 = vmul.f32 %v1197, 1.442695
    %v1200 = vpow.pop %v1199
    %v1201 = vmul.f32 %v1198, 1.442695
    %v1202 = vpow.pop %v1201
    %v1203 = vsel %vm305, %v1200, 0.0
    %1204 = vadd.xlane.f32.xlu0 %v1203
    %v1205 = vpop.xlane.xlu0 %1204
    %v1206 = vsel %vm305, %v1202, 0.0
    %1207 = vadd.xlane.f32.xlu0 %v1206
    %v1208 = vpop.xlane.xlu0 %1207
    %v1209 = vrcp.pop %v1205
    %v1210 = vrcp.pop %v1208
    %v1211 = vmul.f32 %v1200, %v1209
    %v1212 = vmul.f32 %v1202, %v1210
    %v1213 = vpack.c.bf16 %v1211, %v1211
    %v1214 = vpack.c.bf16 %v1212, %v1212
    %v1215 = vpack.c.bf16 %v1136, %v1136
    %v1216 = vpack.c.bf16 %v1138, %v1138
    %v1218 = vsel %vm305, %v1213, 0
    %v1221 = vsel %vm375, %v1215, 0
    %1223 = vmatpush.bf16.msra.mxu0 0
    %1224 = vmatpush.bf16.msra.mxu0 0
    %1225 = vmatpush.bf16.msra.mxu0 0
    %1226 = vmatpush.bf16.msra.mxu0 0
    %1227 = vmatpush.bf16.msra.mxu0 0
    %1228 = vmatpush.bf16.msra.mxu0 0
    %1229 = vmatpush.bf16.msra.mxu0 0
    %1230 = vmatpush.bf16.msra.mxu0 %v1221
    %1231 = vmatmul.bf16.gmra.mxu0 %v1218
    %v1232 = vpop.f32.mrf.mxu0
    %v1233 = vadd.f32 0.0, %v1232
    %v1234 = vpop.f32.mrf.mxu0
    %1235 = vdwg.mxu0
    %v1237 = vsel %vm305, %v1214, 0
    %v1240 = vsel %vm375, %v1216, 0
    %1242 = vmatpush.bf16.msra.mxu0 0
    %1243 = vmatpush.bf16.msra.mxu0 0
    %1244 = vmatpush.bf16.msra.mxu0 0
    %1245 = vmatpush.bf16.msra.mxu0 0
    %1246 = vmatpush.bf16.msra.mxu0 0
    %1247 = vmatpush.bf16.msra.mxu0 0
    %1248 = vmatpush.bf16.msra.mxu0 0
    %1249 = vmatpush.bf16.msra.mxu0 %v1240
    %1250 = vmatmul.bf16.gmra.mxu0 %v1237
    %v1251 = vpop.f32.mrf.mxu0
    %v1252 = vadd.f32 0.0, %v1251
    %v1253 = vpop.f32.mrf.mxu0
    %1254 = vdwg.mxu0
    %v1255 = vpack.c.bf16 %v1252, %v1233
    %v1256 = vpack.c.bf16 %v1141, %v1141
    %v1258 = vsel %vm305, %v1255, 0
    %v1261 = vsel %vm375, %v1256, 0
    %1263 = vmatpush.bf16.msra.mxu0 0
    %1264 = vmatpush.bf16.msra.mxu0 0
    %1265 = vmatpush.bf16.msra.mxu0 0
    %1266 = vmatpush.bf16.msra.mxu0 0
    %1267 = vmatpush.bf16.msra.mxu0 0
    %1268 = vmatpush.bf16.msra.mxu0 0
    %1269 = vmatpush.bf16.msra.mxu0 0
    %1270 = vmatpush.bf16.msra.mxu0 %v1261
    %1271 = vmatmul.bf16.gmra.mxu0 %v1258
    %v1272 = vpop.f32.mrf.mxu0
    %v1273 = vadd.f32 0.0, %v1272
    %v1274 = vpop.f32.mrf.mxu0
    %v1275 = vadd.f32 0.0, %v1274
    %1276 = vdwg.mxu0
    %v1278 = vperm.slane %v1146, 0
    %v1280 = vadd.f32 %v1278, %v1273
    %v1281 = vadd.f32 %v1278, %v1275
    %v1283 = vunpack.c.l.b16 %v1147
    %v1284 = vpack.c.b16 %v1283, %v1283
    %1285 = vrot.lane.b32.xlu0 %v1284, 120
    %v1286 = vpop.permute.xlu0 %1285
    %v1288 = vunpack.c.l.b16 %v1149
    %v1289 = vpack.c.b16 %v1288, %v1288
    %1290 = vrot.lane.b32.xlu0 %v1289, 120
    %v1291 = vpop.permute.xlu0 %1290
    %v1293 = vsel %vm305, %v1286, 0
    %v1296 = vsel %vm305, %v1291, 0
    %1298 = vmatpush.bf16.xpose.msra.mxu0 0
    %1299 = vmatpush.bf16.xpose.msra.mxu0 0
    %1300 = vmatpush.bf16.xpose.msra.mxu0 0
    %1301 = vmatpush.bf16.xpose.msra.mxu0 0
    %1302 = vmatpush.bf16.xpose.msra.mxu0 0
    %1303 = vmatpush.bf16.xpose.msra.mxu0 0
    %1304 = vmatpush.bf16.xpose.msra.mxu0 0
    %1305 = vmatpush.bf16.xpose.msra.mxu0 %v1296
    %1306 = vmatmul.bf16.gmra.mxu0 %v1293
    %v1307 = vpop.f32.mrf.mxu0
    %v1308 = vadd.f32 0.0, %v1307
    %v1309 = vpop.f32.mrf.mxu0
    %1310 = vdwg.mxu0
    %v1312 = vunpack.c.l.b16 %v1148
    %v1313 = vpack.c.b16 %v1312, %v1312
    %1314 = vrot.lane.b32.xlu0 %v1313, 120
    %v1315 = vpop.permute.xlu0 %1314
    %v1317 = vunpack.c.l.b16 %v1150
    %v1318 = vpack.c.b16 %v1317, %v1317
    %1319 = vrot.lane.b32.xlu0 %v1318, 120
    %v1320 = vpop.permute.xlu0 %1319
    %v1322 = vsel %vm305, %v1315, 0
    %v1325 = vsel %vm305, %v1320, 0
    %1327 = vmatpush.bf16.xpose.msra.mxu0 0
    %1328 = vmatpush.bf16.xpose.msra.mxu0 0
    %1329 = vmatpush.bf16.xpose.msra.mxu0 0
    %1330 = vmatpush.bf16.xpose.msra.mxu0 0
    %1331 = vmatpush.bf16.xpose.msra.mxu0 0
    %1332 = vmatpush.bf16.xpose.msra.mxu0 0
    %1333 = vmatpush.bf16.xpose.msra.mxu0 0
    %1334 = vmatpush.bf16.xpose.msra.mxu0 %v1325
    %1335 = vmatmul.bf16.gmra.mxu0 %v1322
    %v1336 = vpop.f32.mrf.mxu0
    %v1337 = vadd.f32 0.0, %v1336
    %v1338 = vpop.f32.mrf.mxu0
    %1339 = vdwg.mxu0
    %v1340 = vmul.f32 %v1308, 0.35355338
    %v1341 = vmul.f32 %v1337, 0.35355338
    %v1342 = vsel %vm305, %v1340, -inf
    %1343 = vmax.xlane.f32.xlu0 %v1342
    %v1344 = vpop.xlane.xlu0 %1343
    %v1345 = vsel %vm305, %v1341, -inf
    %1346 = vmax.xlane.f32.xlu0 %v1345
    %v1347 = vpop.xlane.xlu0 %1346
    %v1348 = vsub.f32 %v1340, %v1344
    %v1349 = vsub.f32 %v1341, %v1347
    %v1350 = vmul.f32 %v1348, 1.442695
    %v1351 = vpow.pop %v1350
    %v1352 = vmul.f32 %v1349, 1.442695
    %v1353 = vpow.pop %v1352
    %v1354 = vsel %vm305, %v1351, 0.0
    %1355 = vadd.xlane.f32.xlu0 %v1354
    %v1356 = vpop.xlane.xlu0 %1355
    %v1357 = vsel %vm305, %v1353, 0.0
    %1358 = vadd.xlane.f32.xlu0 %v1357
    %v1359 = vpop.xlane.xlu0 %1358
    %v1360 = vrcp.pop %v1356
    %v1361 = vrcp.pop %v1359
    %v1362 = vmul.f32 %v1351, %v1360
    %v1363 = vmul.f32 %v1353, %v1361
    %v1364 = vpack.c.bf16 %v1362, %v1362
    %v1365 = vpack.c.bf16 %v1363, %v1363
    %v1367 = vunpack.c.l.b16 %v1215
    %v1368 = vpack.c.b16 %v1367, %v1367
    %1369 = vrot.lane.b32.xlu0 %v1368, 120
    %v1370 = vpop.permute.xlu0 %1369
    %v1372 = vsel %vm305, %v1364, 0
    %v1375 = vsel %vm375, %v1370, 0
    %1377 = vmatpush.bf16.msra.mxu0 0
    %1378 = vmatpush.bf16.msra.mxu0 0
    %1379 = vmatpush.bf16.msra.mxu0 0
    %1380 = vmatpush.bf16.msra.mxu0 0
    %1381 = vmatpush.bf16.msra.mxu0 0
    %1382 = vmatpush.bf16.msra.mxu0 0
    %1383 = vmatpush.bf16.msra.mxu0 0
    %1384 = vmatpush.bf16.msra.mxu0 %v1375
    %1385 = vmatmul.bf16.gmra.mxu0 %v1372
    %v1386 = vpop.f32.mrf.mxu0
    %v1387 = vadd.f32 0.0, %v1386
    %v1388 = vpop.f32.mrf.mxu0
    %1389 = vdwg.mxu0
    %v1391 = vunpack.c.l.b16 %v1216
    %v1392 = vpack.c.b16 %v1391, %v1391
    %1393 = vrot.lane.b32.xlu0 %v1392, 120
    %v1394 = vpop.permute.xlu0 %1393
    %v1396 = vsel %vm305, %v1365, 0
    %v1399 = vsel %vm375, %v1394, 0
    %1401 = vmatpush.bf16.msra.mxu0 0
    %1402 = vmatpush.bf16.msra.mxu0 0
    %1403 = vmatpush.bf16.msra.mxu0 0
    %1404 = vmatpush.bf16.msra.mxu0 0
    %1405 = vmatpush.bf16.msra.mxu0 0
    %1406 = vmatpush.bf16.msra.mxu0 0
    %1407 = vmatpush.bf16.msra.mxu0 0
    %1408 = vmatpush.bf16.msra.mxu0 %v1399
    %1409 = vmatmul.bf16.gmra.mxu0 %v1396
    %v1410 = vpop.f32.mrf.mxu0
    %v1411 = vadd.f32 0.0, %v1410
    %v1412 = vpop.f32.mrf.mxu0
    %1413 = vdwg.mxu0
    %v1414 = vpack.c.bf16 %v1411, %v1387
    %v1415 = vpack.c.bf16 %v1142, %v1142
    %v1417 = vsel %vm305, %v1414, 0
    %v1420 = vsel %vm375, %v1415, 0
    %1422 = vmatpush.bf16.msra.mxu0 0
    %1423 = vmatpush.bf16.msra.mxu0 0
    %1424 = vmatpush.bf16.msra.mxu0 0
    %1425 = vmatpush.bf16.msra.mxu0 0
    %1426 = vmatpush.bf16.msra.mxu0 0
    %1427 = vmatpush.bf16.msra.mxu0 0
    %1428 = vmatpush.bf16.msra.mxu0 0
    %1429 = vmatpush.bf16.msra.mxu0 %v1420
    %1430 = vmatmul.bf16.gmra.mxu0 %v1417
    %v1431 = vpop.f32.mrf.mxu0
    %v1432 = vadd.f32 0.0, %v1431
    %v1433 = vpop.f32.mrf.mxu0
    %v1434 = vadd.f32 0.0, %v1433
    %1435 = vdwg.mxu0
    %v1436 = vadd.f32 %v1280, %v1432
    %v1437 = vadd.f32 %v1281, %v1434
    %1438 = vrot.lane.b32.xlu0 %v1284, 112
    %v1439 = vpop.permute.xlu0 %1438
    %1440 = vrot.lane.b32.xlu0 %v1289, 112
    %v1441 = vpop.permute.xlu0 %1440
    %v1443 = vsel %vm305, %v1439, 0
    %v1446 = vsel %vm305, %v1441, 0
    %1448 = vmatpush.bf16.xpose.msra.mxu0 0
    %1449 = vmatpush.bf16.xpose.msra.mxu0 0
    %1450 = vmatpush.bf16.xpose.msra.mxu0 0
    %1451 = vmatpush.bf16.xpose.msra.mxu0 0
    %1452 = vmatpush.bf16.xpose.msra.mxu0 0
    %1453 = vmatpush.bf16.xpose.msra.mxu0 0
    %1454 = vmatpush.bf16.xpose.msra.mxu0 0
    %1455 = vmatpush.bf16.xpose.msra.mxu0 %v1446
    %1456 = vmatmul.bf16.gmra.mxu0 %v1443
    %v1457 = vpop.f32.mrf.mxu0
    %v1458 = vadd.f32 0.0, %v1457
    %v1459 = vpop.f32.mrf.mxu0
    %1460 = vdwg.mxu0
    %1461 = vrot.lane.b32.xlu0 %v1313, 112
    %v1462 = vpop.permute.xlu0 %1461
    %1463 = vrot.lane.b32.xlu0 %v1318, 112
    %v1464 = vpop.permute.xlu0 %1463
    %v1466 = vsel %vm305, %v1462, 0
    %v1469 = vsel %vm305, %v1464, 0
    %1471 = vmatpush.bf16.xpose.msra.mxu0 0
    %1472 = vmatpush.bf16.xpose.msra.mxu0 0
    %1473 = vmatpush.bf16.xpose.msra.mxu0 0
    %1474 = vmatpush.bf16.xpose.msra.mxu0 0
    %1475 = vmatpush.bf16.xpose.msra.mxu0 0
    %1476 = vmatpush.bf16.xpose.msra.mxu0 0
    %1477 = vmatpush.bf16.xpose.msra.mxu0 0
    %1478 = vmatpush.bf16.xpose.msra.mxu0 %v1469
    %1479 = vmatmul.bf16.gmra.mxu0 %v1466
    %v1480 = vpop.f32.mrf.mxu0
    %v1481 = vadd.f32 0.0, %v1480
    %v1482 = vpop.f32.mrf.mxu0
    %1483 = vdwg.mxu0
    %v1484 = vmul.f32 %v1458, 0.35355338
    %v1485 = vmul.f32 %v1481, 0.35355338
    %v1486 = vsel %vm305, %v1484, -inf
    %1487 = vmax.xlane.f32.xlu0 %v1486
    %v1488 = vpop.xlane.xlu0 %1487
    %v1489 = vsel %vm305, %v1485, -inf
    %1490 = vmax.xlane.f32.xlu0 %v1489
    %v1491 = vpop.xlane.xlu0 %1490
    %v1492 = vsub.f32 %v1484, %v1488
    %v1493 = vsub.f32 %v1485, %v1491
    %v1494 = vmul.f32 %v1492, 1.442695
    %v1495 = vpow.pop %v1494
    %v1496 = vmul.f32 %v1493, 1.442695
    %v1497 = vpow.pop %v1496
    %v1498 = vsel %vm305, %v1495, 0.0
    %1499 = vadd.xlane.f32.xlu0 %v1498
    %v1500 = vpop.xlane.xlu0 %1499
    %v1501 = vsel %vm305, %v1497, 0.0
    %1502 = vadd.xlane.f32.xlu0 %v1501
    %v1503 = vpop.xlane.xlu0 %1502
    %v1504 = vrcp.pop %v1500
    %v1505 = vrcp.pop %v1503
    %v1506 = vmul.f32 %v1495, %v1504
    %v1507 = vmul.f32 %v1497, %v1505
    %v1508 = vpack.c.bf16 %v1506, %v1506
    %v1509 = vpack.c.bf16 %v1507, %v1507
    %1510 = vrot.lane.b32.xlu0 %v1368, 112
    %v1511 = vpop.permute.xlu0 %1510
    %v1513 = vsel %vm305, %v1508, 0
    %v1516 = vsel %vm375, %v1511, 0
    %1518 = vmatpush.bf16.msra.mxu0 0
    %1519 = vmatpush.bf16.msra.mxu0 0
    %1520 = vmatpush.bf16.msra.mxu0 0
    %1521 = vmatpush.bf16.msra.mxu0 0
    %1522 = vmatpush.bf16.msra.mxu0 0
    %1523 = vmatpush.bf16.msra.mxu0 0
    %1524 = vmatpush.bf16.msra.mxu0 0
    %1525 = vmatpush.bf16.msra.mxu0 %v1516
    %1526 = vmatmul.bf16.gmra.mxu0 %v1513
    %v1527 = vpop.f32.mrf.mxu0
    %v1528 = vadd.f32 0.0, %v1527
    %v1529 = vpop.f32.mrf.mxu0
    %1530 = vdwg.mxu0
    %1531 = vrot.lane.b32.xlu0 %v1392, 112
    %v1532 = vpop.permute.xlu0 %1531
    %v1534 = vsel %vm305, %v1509, 0
    %v1537 = vsel %vm375, %v1532, 0
    %1539 = vmatpush.bf16.msra.mxu0 0
    %1540 = vmatpush.bf16.msra.mxu0 0
    %1541 = vmatpush.bf16.msra.mxu0 0
    %1542 = vmatpush.bf16.msra.mxu0 0
    %1543 = vmatpush.bf16.msra.mxu0 0
    %1544 = vmatpush.bf16.msra.mxu0 0
    %1545 = vmatpush.bf16.msra.mxu0 0
    %1546 = vmatpush.bf16.msra.mxu0 %v1537
    %1547 = vmatmul.bf16.gmra.mxu0 %v1534
    %v1548 = vpop.f32.mrf.mxu0
    %v1549 = vadd.f32 0.0, %v1548
    %v1550 = vpop.f32.mrf.mxu0
    %1551 = vdwg.mxu0
    %v1552 = vpack.c.bf16 %v1549, %v1528
    %v1553 = vpack.c.bf16 %v1143, %v1143
    %v1555 = vsel %vm305, %v1552, 0
    %v1558 = vsel %vm375, %v1553, 0
    %1560 = vmatpush.bf16.msra.mxu0 0
    %1561 = vmatpush.bf16.msra.mxu0 0
    %1562 = vmatpush.bf16.msra.mxu0 0
    %1563 = vmatpush.bf16.msra.mxu0 0
    %1564 = vmatpush.bf16.msra.mxu0 0
    %1565 = vmatpush.bf16.msra.mxu0 0
    %1566 = vmatpush.bf16.msra.mxu0 0
    %1567 = vmatpush.bf16.msra.mxu0 %v1558
    %1568 = vmatmul.bf16.gmra.mxu0 %v1555
    %v1569 = vpop.f32.mrf.mxu0
    %v1570 = vadd.f32 0.0, %v1569
    %v1571 = vpop.f32.mrf.mxu0
    %v1572 = vadd.f32 0.0, %v1571
    %1573 = vdwg.mxu0
    %v1574 = vadd.f32 %v1436, %v1570
    %v1575 = vadd.f32 %v1437, %v1572
    %1576 = vrot.lane.b32.xlu0 %v1284, 104
    %v1577 = vpop.permute.xlu0 %1576
    %1578 = vrot.lane.b32.xlu0 %v1289, 104
    %v1579 = vpop.permute.xlu0 %1578
    %v1581 = vsel %vm305, %v1577, 0
    %v1584 = vsel %vm305, %v1579, 0
    %1586 = vmatpush.bf16.xpose.msra.mxu0 0
    %1587 = vmatpush.bf16.xpose.msra.mxu0 0
    %1588 = vmatpush.bf16.xpose.msra.mxu0 0
    %1589 = vmatpush.bf16.xpose.msra.mxu0 0
    %1590 = vmatpush.bf16.xpose.msra.mxu0 0
    %1591 = vmatpush.bf16.xpose.msra.mxu0 0
    %1592 = vmatpush.bf16.xpose.msra.mxu0 0
    %1593 = vmatpush.bf16.xpose.msra.mxu0 %v1584
    %1594 = vmatmul.bf16.gmra.mxu0 %v1581
    %v1595 = vpop.f32.mrf.mxu0
    %v1596 = vadd.f32 0.0, %v1595
    %v1597 = vpop.f32.mrf.mxu0
    %1598 = vdwg.mxu0
    %1599 = vrot.lane.b32.xlu0 %v1313, 104
    %v1600 = vpop.permute.xlu0 %1599
    %1601 = vrot.lane.b32.xlu0 %v1318, 104
    %v1602 = vpop.permute.xlu0 %1601
    %v1604 = vsel %vm305, %v1600, 0
    %v1607 = vsel %vm305, %v1602, 0
    %1609 = vmatpush.bf16.xpose.msra.mxu0 0
    %1610 = vmatpush.bf16.xpose.msra.mxu0 0
    %1611 = vmatpush.bf16.xpose.msra.mxu0 0
    %1612 = vmatpush.bf16.xpose.msra.mxu0 0
    %1613 = vmatpush.bf16.xpose.msra.mxu0 0
    %1614 = vmatpush.bf16.xpose.msra.mxu0 0
    %1615 = vmatpush.bf16.xpose.msra.mxu0 0
    %1616 = vmatpush.bf16.xpose.msra.mxu0 %v1607
    %1617 = vmatmul.bf16.gmra.mxu0 %v1604
    %v1618 = vpop.f32.mrf.mxu0
    %v1619 = vadd.f32 0.0, %v1618
    %v1620 = vpop.f32.mrf.mxu0
    %1621 = vdwg.mxu0
    %v1622 = vmul.f32 %v1596, 0.35355338
    %v1623 = vmul.f32 %v1619, 0.35355338
    %v1624 = vsel %vm305, %v1622, -inf
    %1625 = vmax.xlane.f32.xlu0 %v1624
    %v1626 = vpop.xlane.xlu0 %1625
    %v1627 = vsel %vm305, %v1623, -inf
    %1628 = vmax.xlane.f32.xlu0 %v1627
    %v1629 = vpop.xlane.xlu0 %1628
    %v1630 = vsub.f32 %v1622, %v1626
    %v1631 = vsub.f32 %v1623, %v1629
    %v1632 = vmul.f32 %v1630, 1.442695
    %v1633 = vpow.pop %v1632
    %v1634 = vmul.f32 %v1631, 1.442695
    %v1635 = vpow.pop %v1634
    %v1636 = vsel %vm305, %v1633, 0.0
    %1637 = vadd.xlane.f32.xlu0 %v1636
    %v1638 = vpop.xlane.xlu0 %1637
    %v1639 = vsel %vm305, %v1635, 0.0
    %1640 = vadd.xlane.f32.xlu0 %v1639
    %v1641 = vpop.xlane.xlu0 %1640
    %v1642 = vrcp.pop %v1638
    %v1643 = vrcp.pop %v1641
    %v1644 = vmul.f32 %v1633, %v1642
    %v1645 = vmul.f32 %v1635, %v1643
    %v1646 = vpack.c.bf16 %v1644, %v1644
    %v1647 = vpack.c.bf16 %v1645, %v1645
    %1648 = vrot.lane.b32.xlu0 %v1368, 104
    %v1649 = vpop.permute.xlu0 %1648
    %v1651 = vsel %vm305, %v1646, 0
    %v1654 = vsel %vm375, %v1649, 0
    %1656 = vmatpush.bf16.msra.mxu0 0
    %1657 = vmatpush.bf16.msra.mxu0 0
    %1658 = vmatpush.bf16.msra.mxu0 0
    %1659 = vmatpush.bf16.msra.mxu0 0
    %1660 = vmatpush.bf16.msra.mxu0 0
    %1661 = vmatpush.bf16.msra.mxu0 0
    %1662 = vmatpush.bf16.msra.mxu0 0
    %1663 = vmatpush.bf16.msra.mxu0 %v1654
    %1664 = vmatmul.bf16.gmra.mxu0 %v1651
    %v1665 = vpop.f32.mrf.mxu0
    %v1666 = vadd.f32 0.0, %v1665
    %v1667 = vpop.f32.mrf.mxu0
    %1668 = vdwg.mxu0
    %1669 = vrot.lane.b32.xlu0 %v1392, 104
    %v1670 = vpop.permute.xlu0 %1669
    %v1672 = vsel %vm305, %v1647, 0
    %v1675 = vsel %vm375, %v1670, 0
    %1677 = vmatpush.bf16.msra.mxu0 0
    %1678 = vmatpush.bf16.msra.mxu0 0
    %1679 = vmatpush.bf16.msra.mxu0 0
    %1680 = vmatpush.bf16.msra.mxu0 0
    %1681 = vmatpush.bf16.msra.mxu0 0
    %1682 = vmatpush.bf16.msra.mxu0 0
    %1683 = vmatpush.bf16.msra.mxu0 0
    %1684 = vmatpush.bf16.msra.mxu0 %v1675
    %1685 = vmatmul.bf16.gmra.mxu0 %v1672
    %v1686 = vpop.f32.mrf.mxu0
    %v1687 = vadd.f32 0.0, %v1686
    %v1688 = vpop.f32.mrf.mxu0
    %1689 = vdwg.mxu0
    %v1690 = vpack.c.bf16 %v1687, %v1666
    %v1691 = vpack.c.bf16 %v1144, %v1144
    %v1693 = vsel %vm305, %v1690, 0
    %v1696 = vsel %vm375, %v1691, 0
    %1698 = vmatpush.bf16.msra.mxu0 0
    %1699 = vmatpush.bf16.msra.mxu0 0
    %1700 = vmatpush.bf16.msra.mxu0 0
    %1701 = vmatpush.bf16.msra.mxu0 0
    %1702 = vmatpush.bf16.msra.mxu0 0
    %1703 = vmatpush.bf16.msra.mxu0 0
    %1704 = vmatpush.bf16.msra.mxu0 0
    %1705 = vmatpush.bf16.msra.mxu0 %v1696
    %1706 = vmatmul.bf16.gmra.mxu0 %v1693
    %v1707 = vpop.f32.mrf.mxu0
    %v1708 = vadd.f32 0.0, %v1707
    %v1709 = vpop.f32.mrf.mxu0
    %v1710 = vadd.f32 0.0, %v1709
    %1711 = vdwg.mxu0
    %v1712 = vadd.f32 %v1574, %v1708
    %v1713 = vadd.f32 %v1575, %v1710
    %v1714 = vadd.f32 %v1056, %v1712
    %v1715 = vadd.f32 %v1057, %v1713
    %s1716 = scalar_lea.vmem %s17, 1
    %v1717 = vld [vmem:[%s1716] sm:$0x1]
    %s1718 = scalar_lea.vmem [#allocation11], 1
    %v1719 = vld [vmem:[%s1718] sm:$0x1]
    %v1720 = vsel %vm230, %v1714, 0.0
    %1721 = vadd.xlane.f32.xlu0 %v1720
    %v1722 = vpop.xlane.xlu0 %1721
    %v1723 = vsel %vm230, %v1715, 0.0
    %1724 = vadd.xlane.f32.xlu0 %v1723
    %v1725 = vpop.xlane.xlu0 %1724
    %v1726 = vmul.f32 %v1722, %v886
    %v1727 = vmul.f32 %v1725, %v886
    %v1728 = vsub.f32 %v1714, %v1726
    %v1729 = vsub.f32 %v1715, %v1727
    %v1730 = vmul.f32 %v1728, %v1728
    %v1731 = vmul.f32 %v1729, %v1729
    %v1732 = vsel %vm230, %v1730, 0.0
    %1733 = vadd.xlane.f32.xlu0 %v1732
    %v1734 = vpop.xlane.xlu0 %1733
    %v1735 = vsel %vm230, %v1731, 0.0
    %1736 = vadd.xlane.f32.xlu0 %v1735
    %v1737 = vpop.xlane.xlu0 %1736
    %v1738 = vmul.f32 %v1734, %v886
    %v1739 = vmul.f32 %v1737, %v886
    %v1740 = vadd.f32 %v1738, 1e-05
    %v1741 = vadd.f32 %v1739, 1e-05
    %v1742 = vrsqrt.pop %v1740
    %v1743 = vmul.f32 %v1742, %v1740
    %v1744 = vmul.f32 %v1743, %v1742
    %v1745 = vmul.f32 0.5, %v1744
    %v1746 = vsub.f32 1.5, %v1745
    %v1747 = vmul.f32 %v1742, %v1746
    %vm1748 = vweird.f32 %v1740
    %vm1749 = vweird.f32 %v1742
    %vm1750 = vmor %vm1748, %vm1749
    %v1751 = vsel %vm1750, %v1742, %v1747
    %v1752 = vrsqrt.pop %v1741
    %v1753 = vmul.f32 %v1752, %v1741
    %v1754 = vmul.f32 %v1753, %v1752
    %v1755 = vmul.f32 0.5, %v1754
    %v1756 = vsub.f32 1.5, %v1755
    %v1757 = vmul.f32 %v1752, %v1756
    %vm1758 = vweird.f32 %v1741
    %vm1759 = vweird.f32 %v1752
    %vm1760 = vmor %vm1758, %vm1759
    %v1761 = vsel %vm1760, %v1752, %v1757
    %v1762 = vmul.f32 %v1728, %v1751
    %v1763 = vmul.f32 %v1729, %v1761
    %v1765 = vperm.slane %v1717, 0
    %v1767 = vmul.f32 %v1762, %v1765
    %v1768 = vmul.f32 %v1763, %v1765
    %v1770 = vperm.slane %v1719, 0
    %v1772 = vadd.f32 %v1767, %v1770
    %v1773 = vadd.f32 %v1768, %v1770
    %s1774 = scalar_lea.vmem [#allocation10], 32
    %v1775 = vld [vmem:[%s1774] sm:$0xff]
    %v1776 = vld [vmem:[%s1774 + $0x8] sm:$0xff]
    %v1777 = vld [vmem:[%s1774 + $0x10] sm:$0xff]
    %v1778 = vld [vmem:[%s1774 + $0x18] sm:$0xff]
    %v1779 = vpack.c.bf16 %v1773, %v1772
    %v1780 = vpack.c.bf16 %v1776, %v1775
    %v1781 = vpack.c.bf16 %v1778, %v1777
    %s1782 = scalar_lea.vmem %s14, 1
    %v1783 = vld [vmem:[%s1782] sm:$0x1]
    %v1785 = vperm.slane %v1783, 0
    %v1788 = vsel %vm230, %v1779, 0
    %1790 = vmatpush.bf16.msra.mxu0 0
    %1791 = vmatpush.bf16.msra.mxu0 0
    %1792 = vmatpush.bf16.msra.mxu0 0
    %1793 = vmatpush.bf16.msra.mxu0 0
    %1794 = vmatpush.bf16.msra.mxu0 0
    %1795 = vmatpush.bf16.msra.mxu0 0
    %1796 = vmatpush.bf16.msra.mxu0 %v1781
    %1797 = vmatpush.bf16.msra.mxu0 %v1780
    %1798 = vmatmul.bf16.gmra.mxu0 %v1788
    %v1799 = vpop.f32.mrf.mxu0
    %v1800 = vadd.f32 %v1785, %v1799
    %v1801 = vpop.f32.mrf.mxu0
    %v1802 = vadd.f32 %v1785, %v1801
    %1803 = vdwg.mxu0
    %v1804 = vmax.f32 %v1800, 0.0
    %v1805 = vmax.f32 %v1802, 0.0
    %s1806 = scalar_lea.vmem %s15, 64
    %v1807 = vld [vmem:[%s1806] sm:$0xff]
    %v1808 = vld [vmem:[%s1806 + $0x8] sm:$0xff]
    %v1809 = vld [vmem:[%s1806 + $0x10] sm:$0xff]
    %v1810 = vld [vmem:[%s1806 + $0x18] sm:$0xff]
    %v1811 = vld [vmem:[%s1806 + $0x20] sm:$0xff]
    %v1812 = vld [vmem:[%s1806 + $0x28] sm:$0xff]
    %v1813 = vld [vmem:[%s1806 + $0x30] sm:$0xff]
    %v1814 = vld [vmem:[%s1806 + $0x38] sm:$0xff]
    %v1815 = vpack.c.bf16 %v1805, %v1804
    %v1816 = vpack.c.bf16 %v1808, %v1807
    %v1817 = vpack.c.bf16 %v1810, %v1809
    %v1818 = vpack.c.bf16 %v1812, %v1811
    %v1819 = vpack.c.bf16 %v1814, %v1813
    %s1820 = scalar_lea.vmem %s16, 1
    %v1821 = vld [vmem:[%s1820] sm:$0x1]
    %v1823 = vperm.slane %v1821, 0
    %v1826 = vsel %vm982, %v1815, 0
    %1828 = vmatpush.bf16.msra.mxu0 0
    %1829 = vmatpush.bf16.msra.mxu0 0
    %1830 = vmatpush.bf16.msra.mxu0 0
    %1831 = vmatpush.bf16.msra.mxu0 0
    %1832 = vmatpush.bf16.msra.mxu0 %v1819
    %1833 = vmatpush.bf16.msra.mxu0 %v1818
    %1834 = vmatpush.bf16.msra.mxu0 %v1817
    %1835 = vmatpush.bf16.msra.mxu0 %v1816
    %1836 = vmatmul.bf16.gmra.mxu0 %v1826
    %v1837 = vpop.f32.mrf.mxu0
    %v1838 = vadd.f32 %v1823, %v1837
    %v1839 = vpop.f32.mrf.mxu0
    %v1840 = vadd.f32 %v1823, %v1839
    %1841 = vdwg.mxu0
    %v1842 = vadd.f32 %v1772, %v1838
    %v1843 = vadd.f32 %v1773, %v1840
    %s1844 = scalar_lea.vmem %s19, 1
    %v1845 = vld [vmem:[%s1844] sm:$0x1]
    %s1846 = scalar_lea.vmem %s20, 1
    %v1847 = vld [vmem:[%s1846] sm:$0x1]
    %v1848 = vsel %vm230, %v1842, 0.0
    %1849 = vadd.xlane.f32.xlu0 %v1848
    %v1850 = vpop.xlane.xlu0 %1849
    %v1851 = vsel %vm230, %v1843, 0.0
    %1852 = vadd.xlane.f32.xlu0 %v1851
    %v1853 = vpop.xlane.xlu0 %1852
    %v1854 = vmul.f32 %v1850, %v886
    %v1855 = vmul.f32 %v1853, %v886
    %v1856 = vsub.f32 %v1842, %v1854
    %v1857 = vsub.f32 %v1843, %v1855
    %v1858 = vmul.f32 %v1856, %v1856
    %v1859 = vmul.f32 %v1857, %v1857
    %v1860 = vsel %vm230, %v1858, 0.0
    %1861 = vadd.xlane.f32.xlu0 %v1860
    %v1862 = vpop.xlane.xlu0 %1861
    %v1863 = vsel %vm230, %v1859, 0.0
    %1864 = vadd.xlane.f32.xlu0 %v1863
    %v1865 = vpop.xlane.xlu0 %1864
    %v1866 = vmul.f32 %v1862, %v886
    %v1867 = vmul.f32 %v1865, %v886
    %v1868 = vadd.f32 %v1866, 1e-05
    %v1869 = vadd.f32 %v1867, 1e-05
    %v1870 = vrsqrt.pop %v1868
    %v1871 = vmul.f32 %v1870, %v1868
    %v1872 = vmul.f32 %v1871, %v1870
    %v1873 = vmul.f32 0.5, %v1872
    %v1874 = vsub.f32 1.5, %v1873
    %v1875 = vmul.f32 %v1870, %v1874
    %vm1876 = vweird.f32 %v1868
    %vm1877 = vweird.f32 %v1870
    %vm1878 = vmor %vm1876, %vm1877
    %v1879 = vsel %vm1878, %v1870, %v1875
    %v1880 = vrsqrt.pop %v1869
    %v1881 = vmul.f32 %v1880, %v1869
    %v1882 = vmul.f32 %v1881, %v1880
    %v1883 = vmul.f32 0.5, %v1882
    %v1884 = vsub.f32 1.5, %v1883
    %v1885 = vmul.f32 %v1880, %v1884
    %vm1886 = vweird.f32 %v1869
    %vm1887 = vweird.f32 %v1880
    %vm1888 = vmor %vm1886, %vm1887
    %v1889 = vsel %vm1888, %v1880, %v1885
    %v1890 = vmul.f32 %v1856, %v1879
    %v1891 = vmul.f32 %v1857, %v1889
    %v1893 = vperm.slane %v1845, 0
    %v1895 = vmul.f32 %v1890, %v1893
    %v1896 = vmul.f32 %v1891, %v1893
    %v1898 = vperm.slane %v1847, 0
    %v1900 = vadd.f32 %v1895, %v1898
    %v1901 = vadd.f32 %v1896, %v1898
    %v1902 = vsel %vm230, %v1900, 0.0
    %v1903 = vrot.slane %v1902, 4
    %v1904 = vadd.f32 %v1902, %v1903
    %v1905 = vrot.slane %v1904, 2
    %v1906 = vadd.f32 %v1904, %v1905
    %v1907 = vrot.slane %v1906, 1
    %v1908 = vadd.f32 %v1906, %v1907
    %v1909 = vsel %vm230, %v1901, 0.0
    %v1910 = vrot.slane %v1909, 4
    %v1911 = vadd.f32 %v1909, %v1910
    %v1912 = vrot.slane %v1911, 2
    %v1913 = vadd.f32 %v1911, %v1912
    %v1914 = vrot.slane %v1913, 1
    %v1915 = vadd.f32 %v1913, %v1914
    %v1916 = vrcp.pop 8.0
    %v1917 = vmul.f32 8.0, %v1916
    %v1918 = vsub.f32 1.0, %v1917
    %v1919 = vmul.f32 %v1916, %v1918
    %v1920 = vadd.f32 %v1916, %v1919
    %vm1921 = vweird.f32 %v1916
    %v1922 = vsel %vm1921, %v1916, %v1920
    %v1923 = vmul.f32 %v1908, %v1922
    %v1924 = vmul.f32 %v1915, %v1922
    %v1925 = vsel %vm230, %v1900, -inf
    %v1926 = vrot.slane %v1925, 4
    %v1927 = vmax.f32 %v1925, %v1926
    %v1928 = vrot.slane %v1927, 2
    %v1929 = vmax.f32 %v1927, %v1928
    %v1930 = vrot.slane %v1929, 1
    %v1931 = vmax.f32 %v1929, %v1930
    %v1932 = vsel %vm230, %v1901, -inf
    %v1933 = vrot.slane %v1932, 4
    %v1934 = vmax.f32 %v1932, %v1933
    %v1935 = vrot.slane %v1934, 2
    %v1936 = vmax.f32 %v1934, %v1935
    %v1937 = vrot.slane %v1936, 1
    %v1938 = vmax.f32 %v1936, %v1937
    %v1939 = vld [vmem:[%s21] sm:$0xff]
    %v1940 = vld [vmem:[%s21 + $0x8] sm:$0xff]
    %v1941 = vld [vmem:[%s21 + $0x10] sm:$0xff]
    %v1942 = vld [vmem:[%s21 + $0x18] sm:$0xff]
    %v1943 = vpack.c.bf16 %v1923, %v1923
    %v1944 = vpack.c.bf16 %v1924, %v1924
    %v1945 = vpack.c.bf16 %v1940, %v1939
    %v1946 = vpack.c.bf16 %v1942, %v1941
    %v1947 = vld [vmem:[%s21 + $0x20] sm:$0xff]
    %v1948 = vld [vmem:[%s21 + $0x28] sm:$0xff]
    %v1949 = vld [vmem:[%s21 + $0x30] sm:$0xff]
    %v1950 = vld [vmem:[%s21 + $0x38] sm:$0xff]
    %v1951 = vpack.c.bf16 %v1931, %v1931
    %v1952 = vpack.c.bf16 %v1938, %v1938
    %v1953 = vpack.c.bf16 %v1948, %v1947
    %v1954 = vpack.c.bf16 %v1950, %v1949
    %v1957 = vunpack.c.l.b16 %v1951
    %v1958 = vunpack.c.l.b16 %v1952
    %vm1959 = vcmask 1041409
    %v1960 = vsel %vm1959, %v1958, %v1957
    %v1961 = vpack.c.b16 %v1960, %v1960
    %v1963 = vsel %vm230, %v1961, 0
    %1965 = vmatpush.bf16.msra.mxu0 0
    %1966 = vmatpush.bf16.msra.mxu0 0
    %1967 = vmatpush.bf16.msra.mxu0 0
    %1968 = vmatpush.bf16.msra.mxu0 0
    %1969 = vmatpush.bf16.msra.mxu0 0
    %1970 = vmatpush.bf16.msra.mxu0 0
    %1971 = vmatpush.bf16.msra.mxu0 %v1954
    %1972 = vmatpush.bf16.msra.mxu0 %v1953
    %1973 = vmatmul.bf16.gmra.mxu0 %v1963
    %v1974 = vpop.f32.mrf.mxu0
    %v1975 = vadd.f32 0.0, %v1974
    %v1976 = vpop.f32.mrf.mxu0
    %1977 = vdwg.mxu0
    %v1980 = vunpack.c.l.b16 %v1943
    %v1981 = vunpack.c.l.b16 %v1944
    %v1982 = vsel %vm1959, %v1981, %v1980
    %v1983 = vpack.c.b16 %v1982, %v1982
    %v1985 = vsel %vm230, %v1983, 0
    %1987 = vmatpush.bf16.msra.mxu0 0
    %1988 = vmatpush.bf16.msra.mxu0 0
    %1989 = vmatpush.bf16.msra.mxu0 0
    %1990 = vmatpush.bf16.msra.mxu0 0
    %1991 = vmatpush.bf16.msra.mxu0 0
    %1992 = vmatpush.bf16.msra.mxu0 0
    %1993 = vmatpush.bf16.msra.mxu0 %v1946
    %1994 = vmatpush.bf16.msra.mxu0 %v1945
    %1995 = vmatmul.bf16.gmra.mxu0 %v1985
    %v1996 = vpop.f32.mrf.mxu0
    %v1997 = vadd.f32 %v1975, %v1996
    %v1998 = vpop.f32.mrf.mxu0
    %1999 = vdwg.mxu0
    %v2000 = vld [vmem:[#allocation13] sm:$0x1]
    %v2002 = vperm.slane %v2000, 0
    %v2004 = vadd.f32 %v1997, %v2002
    %vm2005 = vcmask 33792
    %2006 = vst.msk [vmem:[#allocation14] sm:$0x3] %vm2005, %v2004
    // Predicated region
    $region122: #{transformer_model_forward.1} parent=1 // pred_check
      _
    $region123: #{transformer_model_forward.1} parent=1 // pred_check_branch
      %2008 = sbr.rel (0) target = $region125
    $region124: #{transformer_model_forward.1} parent=1 // pred_region
      %2010 = vsyncadd [#allocation4], 0
      %s2012 = sshll.u32 [#allocation14], 4
      %s2013 = int_to_ptr.vmem [resolvable:$true] %s2012
      %s2014 = sshll.u32 %s23, 4
      %s2015 = int_to_ptr.hbm [resolvable:$true] %s2014
      %2017 = dma.vmem_to_hbm [thread:$0]  %s2013, 32, %s2015, [#allocation4]
    $region125: #{transformer_model_forward.1} parent=1 // pred_fallthru
      _
    // Predicated region
    $region126: #{transformer_model_forward.1} parent=1 // pred_check
      _
    $region127: #{transformer_model_forward.1} parent=1 // pred_check_branch
      %2019 = sbr.rel (0) target = $region129
    $region128: #{transformer_model_forward.1} parent=1 // pred_region
      %2021 = dma.done [#allocation4], 32
    $region129: #{transformer_model_forward.1} parent=1 // pred_fallthru
      _
    %2022 = vsyncpa [#allocation3], 1
    %2023 = vsyncpa [#allocation6], 1
    %2024 = vsyncpa [#allocation9], 1
    %2025 = vsyncpa [#allocation12], 1
    %2026 = vsyncpa [#allocation4], 1

</llo_original>
